<compile_context>
chip_gen: v7x
topology: tpu7x:2x2x1
jax: 0.10.0
libtpu: 0.0.40
codegen_flags: <defaults>
</compile_context>

<pallas_src>
import jax
import jax.numpy as jnp
from jax.experimental import pallas as pl
from jax.experimental.pallas import tpu as pltpu


def _upsample_conv_kernel(xpad_ref, w_ref, b_ref, o_ref, slab_ref):
    """One (batch, H-tile) grid step of fused nearest-x2 upsample + 3x3 conv.

    xpad_ref: (1, H+2, W+2, Cin)    bf16 zero-padded input (resident per batch elem)
    w_ref:    (3, 3*Cin, 4*Cout)    bf16 tap-folded, parity-stacked, K-folded weights
    b_ref:    (1, 4*Cout)           f32 bias replicated per parity
    o_ref:    (1, TH, 2, W, 2*Cout) block of the (N, H, 2, W, 2*Cout) output
    slab_ref: (TH+2, W, 3*Cin)      bf16 scratch: column-shifted input slab
    """
    TH = o_ref.shape[1]
    W = o_ref.shape[3]
    Cin = xpad_ref.shape[3]
    K = w_ref.shape[1]           # 3 * Cin
    C4 = w_ref.shape[2]          # 4 * Cout
    C2 = C4 // 2                 # 2 * Cout

    t = pl.program_id(1)
    row0 = pl.multiple_of(t * TH, TH)   # first padded-input row of this H-tile

    # Build the column-shifted slab once per tile:
    #   slab[r, w, c0*Cin:(c0+1)*Cin] = xpad[row0 + r, c0 + w, :]
    # The two sublane-misaligned shifts (c0 = 1, 2) are paid here once instead of
    # once per tap.
    for c0 in range(3):
        slab_ref[:, :, c0 * Cin:(c0 + 1) * Cin] = (
            xpad_ref[0, pl.ds(row0, TH + 2), pl.ds(c0, W), :])

    # 3 MXU matmuls (K = 3*Cin) into an f32 accumulator seeded with the bias
    # (the (1, 4*Cout) broadcast folds into the first add — no separate bias pass).
    acc = b_ref[...]                                         # (1, 4*Cout) f32
    for r0 in range(3):
        lhs = slab_ref[pl.ds(r0, TH), :, :].reshape(TH * W, K)
        acc = acc + jnp.dot(lhs, w_ref[r0], preferred_element_type=jnp.float32)

    # Row-parity halves as dense (TH, W, 2*Cout) slabs.  Columns inside 2*Cout are
    # ordered (col-parity, Cout), so the wrapper reshape to (N, 2H, 2W, Cout) is a
    # pure view — no HBM transpose.
    o_ref[0, :, 0, :, :] = acc[:, :C2].reshape(TH, W, C2).astype(o_ref.dtype)
    o_ref[0, :, 1, :, :] = acc[:, C2:].reshape(TH, W, C2).astype(o_ref.dtype)


def _vmem_capacity_bytes():
    """Per-core VMEM capacity; conservative v7x floor (64 MiB) if the query fails."""
    try:
        cap = getattr(pltpu.get_tpu_info(), "vmem_capacity_bytes", None)
        if cap:
            return int(cap)
    except Exception:
        pass
    return 64 * 1024 * 1024


def _pick_tile_h(H, W, Cin, Cout, *, out_bytes, budget_bytes, in_bufs, w_bufs):
    """Largest H-tile (divisor of H) whose FULL VMEM footprint fits the budget:
    resident padded input, folded weights/bias, slab scratch, f32 accumulator and
    the double-buffered output block."""
    def footprint(th):
        inp = in_bufs * (H + 2) * (W + 2) * Cin * 2           # padded bf16 image
        wgt = w_bufs * 9 * Cin * 4 * Cout * 2                 # folded bf16 weights
        bia = w_bufs * 4 * Cout * 4                           # f32 bias
        slab = (th + 2) * W * 3 * Cin * 2                     # bf16 scratch slab
        acc = th * W * 4 * Cout * 4                           # f32 accumulator
        out = 2 * th * 2 * W * 2 * Cout * out_bytes           # double-buffered output
        return inp + wgt + bia + slab + acc + out

    divisors = [d for d in range(H, 0, -1) if H % d == 0]
    for th in divisors:
        if footprint(th) <= budget_bytes:
            return th
    # Even TH=1 does not fit: the resident input alone exceeds the budget.
    # TODO(synk): manual halo-DMA double-buffering (memory_space=pl.ANY) for that case.
    return divisors[-1]


def upsample_forward(x_nchw, w_oihw, bias, *, tile_h=None, single_buffer=True):
    """PyTorch-equivalent forward: interpolate(scale=2, nearest) -> Conv2d 3x3 pad=1.

    x_nchw: (N, Cin, H, W); w_oihw: (Cout, Cin, 3, 3); bias: (Cout,)
    returns (N, Cout, 2H, 2W) in NCHW, dtype of x.
    """
    N, Cin, H, W = x_nchw.shape
    Cout, _, KH, KW = w_oihw.shape
    assert (KH, KW) == (3, 3), "module default kernel_size=(3,3), padding=1"

    out_dtype = jnp.bfloat16                 # f32 MXU accumulation happens in-kernel
    out_bytes = jnp.dtype(out_dtype).itemsize
    n_bufs = 1 if single_buffer else 2

    vmem_cap = _vmem_capacity_bytes()
    vmem_limit = min(int(vmem_cap * 0.9), 96 * 1024 * 1024)   # 57.6 MiB on v7x, 96 MiB v5e/v6e
    if tile_h is None:
        tile_h = _pick_tile_h(H, W, Cin, Cout, out_bytes=out_bytes,
                              budget_bytes=vmem_limit - (4 << 20),
                              in_bufs=n_bufs, w_bufs=n_bufs)
    assert H % tile_h == 0, (H, tile_h)
    nh = H // tile_h

    # glue: NCHW -> NHWC; conv zero-pad fused with the bf16 downcast (one HBM pass).
    # TODO(synk): handle the 1-pixel conv border in-kernel to drop this extra HBM pass.
    x_nhwc = jnp.transpose(x_nchw, (0, 2, 3, 1))
    xpad = jnp.pad(x_nhwc, ((0, 0), (1, 1), (1, 1), (0, 0))).astype(jnp.bfloat16)

    # Fold the 3x3 taps into per-output-parity 2x2 taps, stack the 4 parities along
    # the output-channel axis, then fold the 3 column taps into K:
    #   wfold[r0, c0*Cin + ci, a*2*Cout + b*Cout + co]
    w_hwio = jnp.transpose(w_oihw, (2, 3, 1, 0)).astype(jnp.float32)  # (3,3,Cin,Cout)
    fold = {(0, 0): (0,), (0, 1): (1, 2), (1, 0): (0, 1), (1, 1): (2,)}
    wstack = jnp.zeros((3, 3, Cin, 2, 2, Cout), jnp.float32)
    for a in range(2):
        for dh in range(2):
            w_rows = sum(w_hwio[kh] for kh in fold[(a, dh)])          # (3, Cin, Cout)
            for b in range(2):
                for dw in range(2):
                    w_tap = sum(w_rows[kw] for kw in fold[(b, dw)])   # (Cin, Cout)
                    wstack = wstack.at[a + dh, b + dw, :, a, b, :].set(w_tap)
    wfold = wstack.reshape(3, 3 * Cin, 4 * Cout).astype(jnp.bfloat16)
    bstack = jnp.tile(bias.astype(jnp.float32), 4).reshape(1, 4 * Cout)

    pipeline_kw = {"pipeline_mode": pl.Buffered(1)} if single_buffer else {}

    cost = pl.CostEstimate(
        flops=2 * N * (2 * H) * (2 * W) * 9 * Cin * Cout,
        transcendentals=0,
        bytes_accessed=(N * (H + 2) * (W + 2) * Cin * 2
                        + 9 * Cin * 4 * Cout * 2 + 4 * Cout * 4
                        + N * 4 * H * W * Cout * out_bytes))

    out = pl.pallas_call(
        _upsample_conv_kernel,
        out_shape=jax.ShapeDtypeStruct((N, H, 2, W, 2 * Cout), out_dtype),
        grid=(N, nh),
        in_specs=[
            # whole padded image per batch element; constant block index across the
            # H-tile axis -> DMA'd once per n and re-used (single-buffered).
            pl.BlockSpec((1, H + 2, W + 2, Cin), lambda n, t: (n, 0, 0, 0),
                         **pipeline_kw),
            pl.BlockSpec((3, 3 * Cin, 4 * Cout), lambda n, t: (0, 0, 0),
                         **pipeline_kw),
            pl.BlockSpec((1, 4 * Cout), lambda n, t: (0, 0), **pipeline_kw),
        ],
        out_specs=pl.BlockSpec((1, tile_h, 2, W, 2 * Cout),
                               lambda n, t: (n, t, 0, 0, 0)),
        scratch_shapes=[pltpu.VMEM((tile_h + 2, W, 3 * Cin), jnp.bfloat16)],
        compiler_params=pltpu.CompilerParams(
            dimension_semantics=("parallel", "parallel"),
            vmem_limit_bytes=vmem_limit),
        cost_estimate=cost,
    )(xpad, wfold, bstack)

    # Pure reshape (no data movement): (N, H, 2, W, 2*Cout) -> (N, 2H, 2W, Cout);
    # the cast back to the input dtype fuses with the single unavoidable
    # NHWC -> NCHW glue transpose.
    # TODO(synk): add a W-tile grid axis (out block (1, TH, 2, TW, 2*Cout)) for very
    # wide W / large Cout layers where the output block alone would force TH -> 1.
    out = out.reshape(N, 2 * H, 2 * W, Cout)
    return jnp.transpose(out, (0, 3, 1, 2)).astype(x_nchw.dtype)


if __name__ == "__main__":
    key = jax.random.PRNGKey(0)
    kx, kw, kb = jax.random.split(key, 3)
    N, Cin, H, W, Cout = 2, 4, 16, 16, 8

    x = jax.random.normal(kx, (N, Cin, H, W), dtype=jnp.float32)
    # deterministic synthetic Conv2d(d_in=4, d_out=8, 3x3) parameters
    w = 0.1 * jax.random.normal(kw, (Cout, Cin, 3, 3), dtype=jnp.float32)
    b = 0.1 * jax.random.normal(kb, (Cout,), dtype=jnp.float32)

    fwd = jax.jit(upsample_forward, static_argnames=("tile_h", "single_buffer"))
    try:
        y = jax.block_until_ready(fwd(x, w, b, tile_h=8))     # tile_h=8 -> grid (2, 2)
    except Exception:
        # This jax build rejects pipeline_mode=pl.Buffered: fall back to default
        # double-buffering (identical kernel math, slightly larger VMEM footprint).
        y = jax.block_until_ready(fwd(x, w, b, tile_h=8, single_buffer=False))

    # plain-JAX reference: nearest x2 upsample, then 3x3 conv with padding=1
    xu = jnp.repeat(jnp.repeat(x, 2, axis=2), 2, axis=3)
    ref = jax.lax.conv_general_dilated(
        xu, w, window_strides=(1, 1), padding=((1, 1), (1, 1)),
        dimension_numbers=("NCHW", "OIHW", "NCHW"))
    ref = ref + b.reshape(1, Cout, 1, 1)

    assert y.shape == (N, Cout, 2 * H, 2 * W)
    assert y.dtype == ref.dtype
    err = float(jnp.max(jnp.abs(y - ref)))
    assert err < 5e-2, err  # bf16 MXU operands + bf16 output, f32 accumulation
    print("KERNEL_OK")
</pallas_src>

<mosaic_0001>
module attributes {stable_mosaic.version = 11 : i64} {
  func.func @_upsample_conv_kernel(%arg0: i32, %arg1: i32, %arg2: memref<1x18x18x4xbf16, #tpu.memory_space<vmem>>, %arg3: memref<3x12x32xbf16, #tpu.memory_space<vmem>>, %arg4: memref<1x32xf32, #tpu.memory_space<vmem>>, %arg5: memref<1x8x2x16x16xbf16, #tpu.memory_space<vmem>>, %arg6: memref<10x16x12xbf16, #tpu.memory_space<vmem>>) attributes {dimension_semantics = [#tpu.dimension_semantics<parallel>, #tpu.dimension_semantics<parallel>], iteration_bounds = array<i64: 2, 2>, scalar_prefetch = 0 : i64, scratch_operands = 1 : i64, tpu.core_type = #tpu.core_type<tc>, window_params = [{pipeline_mode = #tpu.pipeline_mode<synchronous>, transform_indices = @transform_0, window_bounds = array<i64: 1, 18, 18, 4>}, {pipeline_mode = #tpu.pipeline_mode<synchronous>, transform_indices = @transform_1, window_bounds = array<i64: 3, 12, 32>}, {pipeline_mode = #tpu.pipeline_mode<synchronous>, transform_indices = @transform_2, window_bounds = array<i64: 1, 32>}, {transform_indices = @transform_3, window_bounds = array<i64: 1, 8, 2, 16, 16>}]} {
    %c8_i32 = arith.constant 8 : i32
    %0 = arith.muli %arg1, %c8_i32 : i32
    %1 = tpu.assume_multiple %0, 8 : i32
    %c0 = arith.constant 0 : index
    %2 = arith.index_cast %1 : i32 to index
    %c0_0 = arith.constant 0 : index
    %c0_1 = arith.constant 0 : index
    %3 = vector.load %arg2[%c0, %2, %c0_0, %c0_1] : memref<1x18x18x4xbf16, #tpu.memory_space<vmem>>, vector<1x10x16x4xbf16>
    %4 = vector.shape_cast %3 : vector<1x10x16x4xbf16> to vector<10x16x4xbf16>
    %c0_2 = arith.constant 0 : index
    %c0_3 = arith.constant 0 : index
    %c0_4 = arith.constant 0 : index
    %5 = vector.load %arg6[%c0_2, %c0_3, %c0_4] : memref<10x16x12xbf16, #tpu.memory_space<vmem>>, vector<10x16x4xbf16>
    tpu.vector_store %arg6[%c0_2, %c0_3, %c0_4], %4 {strides = array<i32>} : memref<10x16x12xbf16, #tpu.memory_space<vmem>>, vector<10x16x4xbf16>,
    %c0_5 = arith.constant 0 : index
    %6 = arith.index_cast %1 : i32 to index
    %c1 = arith.constant 1 : index
    %c0_6 = arith.constant 0 : index
    %7 = vector.load %arg2[%c0_5, %6, %c1, %c0_6] : memref<1x18x18x4xbf16, #tpu.memory_space<vmem>>, vector<1x10x16x4xbf16>
    %8 = vector.shape_cast %7 : vector<1x10x16x4xbf16> to vector<10x16x4xbf16>
    %c0_7 = arith.constant 0 : index
    %c0_8 = arith.constant 0 : index
    %c4 = arith.constant 4 : index
    %9 = vector.load %arg6[%c0_7, %c0_8, %c4] : memref<10x16x12xbf16, #tpu.memory_space<vmem>>, vector<10x16x4xbf16>
    tpu.vector_store %arg6[%c0_7, %c0_8, %c4], %8 {strides = array<i32>} : memref<10x16x12xbf16, #tpu.memory_space<vmem>>, vector<10x16x4xbf16>,
    %c0_9 = arith.constant 0 : index
    %10 = arith.index_cast %1 : i32 to index
    %c2 = arith.constant 2 : index
    %c0_10 = arith.constant 0 : index
    %11 = vector.load %arg2[%c0_9, %10, %c2, %c0_10] : memref<1x18x18x4xbf16, #tpu.memory_space<vmem>>, vector<1x10x16x4xbf16>
    %12 = vector.shape_cast %11 : vector<1x10x16x4xbf16> to vector<10x16x4xbf16>
    %c0_11 = arith.constant 0 : index
    %c0_12 = arith.constant 0 : index
    %c8 = arith.constant 8 : index
    %13 = vector.load %arg6[%c0_11, %c0_12, %c8] : memref<10x16x12xbf16, #tpu.memory_space<vmem>>, vector<10x16x4xbf16>
    tpu.vector_store %arg6[%c0_11, %c0_12, %c8], %12 {strides = array<i32>} : memref<10x16x12xbf16, #tpu.memory_space<vmem>>, vector<10x16x4xbf16>,
    %c0_13 = arith.constant 0 : index
    %c0_14 = arith.constant 0 : index
    %14 = vector.load %arg4[%c0_13, %c0_14] : memref<1x32xf32, #tpu.memory_space<vmem>>, vector<1x32xf32>
    %c0_15 = arith.constant 0 : index
    %c0_16 = arith.constant 0 : index
    %c0_17 = arith.constant 0 : index
    %15 = vector.load %arg6[%c0_15, %c0_16, %c0_17] : memref<10x16x12xbf16, #tpu.memory_space<vmem>>, vector<8x16x12xbf16>
    %16 = vector.shape_cast %15 : vector<8x16x12xbf16> to vector<128x12xbf16>
    %c0_18 = arith.constant 0 : index
    %c0_19 = arith.constant 0 : index
    %c0_20 = arith.constant 0 : index
    %17 = vector.load %arg3[%c0_18, %c0_19, %c0_20] : memref<3x12x32xbf16, #tpu.memory_space<vmem>>, vector<1x12x32xbf16>
    %18 = vector.shape_cast %17 : vector<1x12x32xbf16> to vector<12x32xbf16>
    %cst = arith.constant dense<0.000000e+00> : vector<128x32xf32>
    %19 = tpu.matmul %16, %18, %cst {dimension_numbers = #tpu.dot_dimension_numbers<[1], [0], [0], [1], [0, 0, 1, 1], [], []>} : vector<128x12xbf16>, vector<12x32xbf16>, vector<128x32xf32> -> vector<128x32xf32>
    %20 = vector.broadcast %14 : vector<1x32xf32> to vector<128x32xf32>
    %21 = arith.addf %20, %19 : vector<128x32xf32>
    %c1_21 = arith.constant 1 : index
    %c0_22 = arith.constant 0 : index
    %c0_23 = arith.constant 0 : index
    %22 = vector.load %arg6[%c1_21, %c0_22, %c0_23] : memref<10x16x12xbf16, #tpu.memory_space<vmem>>, vector<8x16x12xbf16>
    %23 = vector.shape_cast %22 : vector<8x16x12xbf16> to vector<128x12xbf16>
    %c1_24 = arith.constant 1 : index
    %c0_25 = arith.constant 0 : index
    %c0_26 = arith.constant 0 : index
    %24 = vector.load %arg3[%c1_24, %c0_25, %c0_26] : memref<3x12x32xbf16, #tpu.memory_space<vmem>>, vector<1x12x32xbf16>
    %25 = vector.shape_cast %24 : vector<1x12x32xbf16> to vector<12x32xbf16>
    %cst_27 = arith.constant dense<0.000000e+00> : vector<128x32xf32>
    %26 = tpu.matmul %23, %25, %cst_27 {dimension_numbers = #tpu.dot_dimension_numbers<[1], [0], [0], [1], [0, 0, 1, 1], [], []>} : vector<128x12xbf16>, vector<12x32xbf16>, vector<128x32xf32> -> vector<128x32xf32>
    %27 = arith.addf %21, %26 : vector<128x32xf32>
    %c2_28 = arith.constant 2 : index
    %c0_29 = arith.constant 0 : index
    %c0_30 = arith.constant 0 : index
    %28 = vector.load %arg6[%c2_28, %c0_29, %c0_30] : memref<10x16x12xbf16, #tpu.memory_space<vmem>>, vector<8x16x12xbf16>
    %29 = vector.shape_cast %28 : vector<8x16x12xbf16> to vector<128x12xbf16>
    %c2_31 = arith.constant 2 : index
    %c0_32 = arith.constant 0 : index
    %c0_33 = arith.constant 0 : index
    %30 = vector.load %arg3[%c2_31, %c0_32, %c0_33] : memref<3x12x32xbf16, #tpu.memory_space<vmem>>, vector<1x12x32xbf16>
    %31 = vector.shape_cast %30 : vector<1x12x32xbf16> to vector<12x32xbf16>
    %cst_34 = arith.constant dense<0.000000e+00> : vector<128x32xf32>
    %32 = tpu.matmul %29, %31, %cst_34 {dimension_numbers = #tpu.dot_dimension_numbers<[1], [0], [0], [1], [0, 0, 1, 1], [], []>} : vector<128x12xbf16>, vector<12x32xbf16>, vector<128x32xf32> -> vector<128x32xf32>
    %33 = arith.addf %27, %32 : vector<128x32xf32>
    %34 = vector.extract_strided_slice %33 {offsets = [0, 0], sizes = [128, 16], strides = [1, 1]} : vector<128x32xf32> to vector<128x16xf32>
    %35 = vector.shape_cast %34 : vector<128x16xf32> to vector<8x16x16xf32>
    %36 = arith.truncf %35 : vector<8x16x16xf32> to vector<8x16x16xbf16>
    %c0_35 = arith.constant 0 : index
    %c0_36 = arith.constant 0 : index
    %c0_37 = arith.constant 0 : index
    %c0_38 = arith.constant 0 : index
    %c0_39 = arith.constant 0 : index
    %37 = vector.load %arg5[%c0_35, %c0_36, %c0_37, %c0_38, %c0_39] : memref<1x8x2x16x16xbf16, #tpu.memory_space<vmem>>, vector<1x8x1x16x16xbf16>
    %38 = vector.shape_cast %37 : vector<1x8x1x16x16xbf16> to vector<8x16x16xbf16>
    %39 = vector.shape_cast %36 : vector<8x16x16xbf16> to vector<1x8x1x16x16xbf16>
    tpu.vector_store %arg5[%c0_35, %c0_36, %c0_37, %c0_38, %c0_39], %39 {strides = array<i32>} : memref<1x8x2x16x16xbf16, #tpu.memory_space<vmem>>, vector<1x8x1x16x16xbf16>,
    %40 = vector.extract_strided_slice %33 {offsets = [0, 16], sizes = [128, 16], strides = [1, 1]} : vector<128x32xf32> to vector<128x16xf32>
    %41 = vector.shape_cast %40 : vector<128x16xf32> to vector<8x16x16xf32>
    %42 = arith.truncf %41 : vector<8x16x16xf32> to vector<8x16x16xbf16>
    %c0_40 = arith.constant 0 : index
    %c0_41 = arith.constant 0 : index
    %c1_42 = arith.constant 1 : index
    %c0_43 = arith.constant 0 : index
    %c0_44 = arith.constant 0 : index
    %43 = vector.load %arg5[%c0_40, %c0_41, %c1_42, %c0_43, %c0_44] : memref<1x8x2x16x16xbf16, #tpu.memory_space<vmem>>, vector<1x8x1x16x16xbf16>
    %44 = vector.shape_cast %43 : vector<1x8x1x16x16xbf16> to vector<8x16x16xbf16>
    %45 = vector.shape_cast %42 : vector<8x16x16xbf16> to vector<1x8x1x16x16xbf16>
    tpu.vector_store %arg5[%c0_40, %c0_41, %c1_42, %c0_43, %c0_44], %45 {strides = array<i32>} : memref<1x8x2x16x16xbf16, #tpu.memory_space<vmem>>, vector<1x8x1x16x16xbf16>,
    return
  }
  func.func @transform_0(%arg0: i32, %arg1: i32) -> (i32, i32, i32, i32) {
    %c0_i32 = arith.constant 0 : i32
    %c0_i32_0 = arith.constant 0 : i32
    %c0_i32_1 = arith.constant 0 : i32
    %c0_i32_2 = arith.constant 0 : i32
    return %arg0, %c0_i32, %c0_i32_0, %c0_i32_1 : i32, i32, i32, i32
  }
  func.func @transform_1(%arg0: i32, %arg1: i32) -> (i32, i32, i32) {
    %c0_i32 = arith.constant 0 : i32
    %c0_i32_0 = arith.constant 0 : i32
    %c0_i32_1 = arith.constant 0 : i32
    %c0_i32_2 = arith.constant 0 : i32
    return %c0_i32, %c0_i32_0, %c0_i32_1 : i32, i32, i32
  }
  func.func @transform_2(%arg0: i32, %arg1: i32) -> (i32, i32) {
    %c0_i32 = arith.constant 0 : i32
    %c0_i32_0 = arith.constant 0 : i32
    %c0_i32_1 = arith.constant 0 : i32
    return %c0_i32, %c0_i32_0 : i32, i32
  }
  func.func @transform_3(%arg0: i32, %arg1: i32) -> (i32, i32, i32, i32, i32) {
    %c0_i32 = arith.constant 0 : i32
    %c0_i32_0 = arith.constant 0 : i32
    %c0_i32_1 = arith.constant 0 : i32
    %c0_i32_2 = arith.constant 0 : i32
    return %arg0, %arg1, %c0_i32, %c0_i32_0, %c0_i32_1 : i32, i32, i32, i32, i32
  }
}

module attributes {stable_mosaic.version = 11 : i64} {
  func.func @_upsample_conv_kernel(%arg0: i32, %arg1: i32, %arg2: memref<1x18x18x4xbf16, #tpu.memory_space<vmem>>, %arg3: memref<3x12x32xbf16, #tpu.memory_space<vmem>>, %arg4: memref<1x32xf32, #tpu.memory_space<vmem>>, %arg5: memref<1x8x2x16x16xbf16, #tpu.memory_space<vmem>>, %arg6: memref<10x16x12xbf16, #tpu.memory_space<vmem>>) attributes {dimension_semantics = [#tpu.dimension_semantics<parallel>, #tpu.dimension_semantics<parallel>], iteration_bounds = array<i64: 2, 2>, scalar_prefetch = 0 : i64, scratch_operands = 1 : i64, tpu.core_type = #tpu.core_type<tc>, window_params = [{transform_indices = @transform_0, window_bounds = array<i64: 1, 18, 18, 4>}, {pipeline_mode = #tpu.pipeline_mode<synchronous>, transform_indices = @transform_1, window_bounds = array<i64: 3, 12, 32>}, {pipeline_mode = #tpu.pipeline_mode<synchronous>, transform_indices = @transform_2, window_bounds = array<i64: 1, 32>}, {transform_indices = @transform_3, window_bounds = array<i64: 1, 8, 2, 16, 16>}]} {
    %c8_i32 = arith.constant 8 : i32
    %0 = arith.muli %arg1, %c8_i32 : i32
    %1 = tpu.assume_multiple %0, 8 : i32
    %c0 = arith.constant 0 : index
    %2 = arith.index_cast %1 : i32 to index
    %c0_0 = arith.constant 0 : index
    %c0_1 = arith.constant 0 : index
    %3 = vector.load %arg2[%c0, %2, %c0_0, %c0_1] : memref<1x18x18x4xbf16, #tpu.memory_space<vmem>>, vector<1x10x16x4xbf16>
    %4 = vector.shape_cast %3 : vector<1x10x16x4xbf16> to vector<10x16x4xbf16>
    %c0_2 = arith.constant 0 : index
    %c0_3 = arith.constant 0 : index
    %c0_4 = arith.constant 0 : index
    %5 = vector.load %arg6[%c0_2, %c0_3, %c0_4] : memref<10x16x12xbf16, #tpu.memory_space<vmem>>, vector<10x16x4xbf16>
    tpu.vector_store %arg6[%c0_2, %c0_3, %c0_4], %4 {strides = array<i32>} : memref<10x16x12xbf16, #tpu.memory_space<vmem>>, vector<10x16x4xbf16>,
    %c0_5 = arith.constant 0 : index
    %6 = arith.index_cast %1 : i32 to index
    %c1 = arith.constant 1 : index
    %c0_6 = arith.constant 0 : index
    %7 = vector.load %arg2[%c0_5, %6, %c1, %c0_6] : memref<1x18x18x4xbf16, #tpu.memory_space<vmem>>, vector<1x10x16x4xbf16>
    %8 = vector.shape_cast %7 : vector<1x10x16x4xbf16> to vector<10x16x4xbf16>
    %c0_7 = arith.constant 0 : index
    %c0_8 = arith.constant 0 : index
    %c4 = arith.constant 4 : index
    %9 = vector.load %arg6[%c0_7, %c0_8, %c4] : memref<10x16x12xbf16, #tpu.memory_space<vmem>>, vector<10x16x4xbf16>
    tpu.vector_store %arg6[%c0_7, %c0_8, %c4], %8 {strides = array<i32>} : memref<10x16x12xbf16, #tpu.memory_space<vmem>>, vector<10x16x4xbf16>,
    %c0_9 = arith.constant 0 : index
    %10 = arith.index_cast %1 : i32 to index
    %c2 = arith.constant 2 : index
    %c0_10 = arith.constant 0 : index
    %11 = vector.load %arg2[%c0_9, %10, %c2, %c0_10] : memref<1x18x18x4xbf16, #tpu.memory_space<vmem>>, vector<1x10x16x4xbf16>
    %12 = vector.shape_cast %11 : vector<1x10x16x4xbf16> to vector<10x16x4xbf16>
    %c0_11 = arith.constant 0 : index
    %c0_12 = arith.constant 0 : index
    %c8 = arith.constant 8 : index
    %13 = vector.load %arg6[%c0_11, %c0_12, %c8] : memref<10x16x12xbf16, #tpu.memory_space<vmem>>, vector<10x16x4xbf16>
    tpu.vector_store %arg6[%c0_11, %c0_12, %c8], %12 {strides = array<i32>} : memref<10x16x12xbf16, #tpu.memory_space<vmem>>, vector<10x16x4xbf16>,
    %c0_13 = arith.constant 0 : index
    %c0_14 = arith.constant 0 : index
    %14 = vector.load %arg4[%c0_13, %c0_14] : memref<1x32xf32, #tpu.memory_space<vmem>>, vector<1x32xf32>
    %c0_15 = arith.constant 0 : index
    %c0_16 = arith.constant 0 : index
    %c0_17 = arith.constant 0 : index
    %15 = vector.load %arg6[%c0_15, %c0_16, %c0_17] : memref<10x16x12xbf16, #tpu.memory_space<vmem>>, vector<8x16x12xbf16>
    %16 = vector.shape_cast %15 : vector<8x16x12xbf16> to vector<128x12xbf16>
    %c0_18 = arith.constant 0 : index
    %c0_19 = arith.constant 0 : index
    %c0_20 = arith.constant 0 : index
    %17 = vector.load %arg3[%c0_18, %c0_19, %c0_20] : memref<3x12x32xbf16, #tpu.memory_space<vmem>>, vector<1x12x32xbf16>
    %18 = vector.shape_cast %17 : vector<1x12x32xbf16> to vector<12x32xbf16>
    %cst = arith.constant dense<0.000000e+00> : vector<128x32xf32>
    %19 = tpu.matmul %16, %18, %cst {dimension_numbers = #tpu.dot_dimension_numbers<[1], [0], [0], [1], [0, 0, 1, 1], [], []>} : vector<128x12xbf16>, vector<12x32xbf16>, vector<128x32xf32> -> vector<128x32xf32>
    %20 = vector.broadcast %14 : vector<1x32xf32> to vector<128x32xf32>
    %21 = arith.addf %20, %19 : vector<128x32xf32>
    %c1_21 = arith.constant 1 : index
    %c0_22 = arith.constant 0 : index
    %c0_23 = arith.constant 0 : index
    %22 = vector.load %arg6[%c1_21, %c0_22, %c0_23] : memref<10x16x12xbf16, #tpu.memory_space<vmem>>, vector<8x16x12xbf16>
    %23 = vector.shape_cast %22 : vector<8x16x12xbf16> to vector<128x12xbf16>
    %c1_24 = arith.constant 1 : index
    %c0_25 = arith.constant 0 : index
    %c0_26 = arith.constant 0 : index
    %24 = vector.load %arg3[%c1_24, %c0_25, %c0_26] : memref<3x12x32xbf16, #tpu.memory_space<vmem>>, vector<1x12x32xbf16>
    %25 = vector.shape_cast %24 : vector<1x12x32xbf16> to vector<12x32xbf16>
    %cst_27 = arith.constant dense<0.000000e+00> : vector<128x32xf32>
    %26 = tpu.matmul %23, %25, %cst_27 {dimension_numbers = #tpu.dot_dimension_numbers<[1], [0], [0], [1], [0, 0, 1, 1], [], []>} : vector<128x12xbf16>, vector<12x32xbf16>, vector<128x32xf32> -> vector<128x32xf32>
    %27 = arith.addf %21, %26 : vector<128x32xf32>
    %c2_28 = arith.constant 2 : index
    %c0_29 = arith.constant 0 : index
    %c0_30 = arith.constant 0 : index
    %28 = vector.load %arg6[%c2_28, %c0_29, %c0_30] : memref<10x16x12xbf16, #tpu.memory_space<vmem>>, vector<8x16x12xbf16>
    %29 = vector.shape_cast %28 : vector<8x16x12xbf16> to vector<128x12xbf16>
    %c2_31 = arith.constant 2 : index
    %c0_32 = arith.constant 0 : index
    %c0_33 = arith.constant 0 : index
    %30 = vector.load %arg3[%c2_31, %c0_32, %c0_33] : memref<3x12x32xbf16, #tpu.memory_space<vmem>>, vector<1x12x32xbf16>
    %31 = vector.shape_cast %30 : vector<1x12x32xbf16> to vector<12x32xbf16>
    %cst_34 = arith.constant dense<0.000000e+00> : vector<128x32xf32>
    %32 = tpu.matmul %29, %31, %cst_34 {dimension_numbers = #tpu.dot_dimension_numbers<[1], [0], [0], [1], [0, 0, 1, 1], [], []>} : vector<128x12xbf16>, vector<12x32xbf16>, vector<128x32xf32> -> vector<128x32xf32>
    %33 = arith.addf %27, %32 : vector<128x32xf32>
    %34 = vector.extract_strided_slice %33 {offsets = [0, 0], sizes = [128, 16], strides = [1, 1]} : vector<128x32xf32> to vector<128x16xf32>
    %35 = vector.shape_cast %34 : vector<128x16xf32> to vector<8x16x16xf32>
    %36 = arith.truncf %35 : vector<8x16x16xf32> to vector<8x16x16xbf16>
    %c0_35 = arith.constant 0 : index
    %c0_36 = arith.constant 0 : index
    %c0_37 = arith.constant 0 : index
    %c0_38 = arith.constant 0 : index
    %c0_39 = arith.constant 0 : index
    %37 = vector.load %arg5[%c0_35, %c0_36, %c0_37, %c0_38, %c0_39] : memref<1x8x2x16x16xbf16, #tpu.memory_space<vmem>>, vector<1x8x1x16x16xbf16>
    %38 = vector.shape_cast %37 : vector<1x8x1x16x16xbf16> to vector<8x16x16xbf16>
    %39 = vector.shape_cast %36 : vector<8x16x16xbf16> to vector<1x8x1x16x16xbf16>
    tpu.vector_store %arg5[%c0_35, %c0_36, %c0_37, %c0_38, %c0_39], %39 {strides = array<i32>} : memref<1x8x2x16x16xbf16, #tpu.memory_space<vmem>>, vector<1x8x1x16x16xbf16>,
    %40 = vector.extract_strided_slice %33 {offsets = [0, 16], sizes = [128, 16], strides = [1, 1]} : vector<128x32xf32> to vector<128x16xf32>
    %41 = vector.shape_cast %40 : vector<128x16xf32> to vector<8x16x16xf32>
    %42 = arith.truncf %41 : vector<8x16x16xf32> to vector<8x16x16xbf16>
    %c0_40 = arith.constant 0 : index
    %c0_41 = arith.constant 0 : index
    %c1_42 = arith.constant 1 : index
    %c0_43 = arith.constant 0 : index
    %c0_44 = arith.constant 0 : index
    %43 = vector.load %arg5[%c0_40, %c0_41, %c1_42, %c0_43, %c0_44] : memref<1x8x2x16x16xbf16, #tpu.memory_space<vmem>>, vector<1x8x1x16x16xbf16>
    %44 = vector.shape_cast %43 : vector<1x8x1x16x16xbf16> to vector<8x16x16xbf16>
    %45 = vector.shape_cast %42 : vector<8x16x16xbf16> to vector<1x8x1x16x16xbf16>
    tpu.vector_store %arg5[%c0_40, %c0_41, %c1_42, %c0_43, %c0_44], %45 {strides = array<i32>} : memref<1x8x2x16x16xbf16, #tpu.memory_space<vmem>>, vector<1x8x1x16x16xbf16>,
    return
  }
  func.func @transform_0(%arg0: i32, %arg1: i32) -> (i32, i32, i32, i32) {
    %c0_i32 = arith.constant 0 : i32
    %c0_i32_0 = arith.constant 0 : i32
    %c0_i32_1 = arith.constant 0 : i32
    %c0_i32_2 = arith.constant 0 : i32
    return %arg0, %c0_i32, %c0_i32_0, %c0_i32_1 : i32, i32, i32, i32
  }
  func.func @transform_1(%arg0: i32, %arg1: i32) -> (i32, i32, i32) {
    %c0_i32 = arith.constant 0 : i32
    %c0_i32_0 = arith.constant 0 : i32
    %c0_i32_1 = arith.constant 0 : i32
    %c0_i32_2 = arith.constant 0 : i32
    return %c0_i32, %c0_i32_0, %c0_i32_1 : i32, i32, i32
  }
  func.func @transform_2(%arg0: i32, %arg1: i32) -> (i32, i32) {
    %c0_i32 = arith.constant 0 : i32
    %c0_i32_0 = arith.constant 0 : i32
    %c0_i32_1 = arith.constant 0 : i32
    return %c0_i32, %c0_i32_0 : i32, i32
  }
  func.func @transform_3(%arg0: i32, %arg1: i32) -> (i32, i32, i32, i32, i32) {
    %c0_i32 = arith.constant 0 : i32
    %c0_i32_0 = arith.constant 0 : i32
    %c0_i32_1 = arith.constant 0 : i32
    %c0_i32_2 = arith.constant 0 : i32
    return %arg0, %arg1, %c0_i32, %c0_i32_0, %c0_i32_1 : i32, i32, i32, i32, i32
  }
}

</mosaic_0001>

<llo_original>
// kernel: tile.8
$region0: #{tile.8}
  #allocation0 [shape = 's32[1]{0}', space=sflag, size = 0x4, scoped, tag = 'scoped memory for tile.8']
  %s0 = inlined_call_operand.vmem [shape: f32[8], index: 0, kind: input, shape index: {}]
  %s1 = inlined_call_operand.vmem [shape: f32[4,8], index: 1, kind: output, shape index: {}]
  // Predicated region
  $region2: #{tile.8} parent=0 // pred_check
    _
  $region3: #{tile.8} parent=0 // pred_check_branch
    %3 = sbr.rel (0) target = $region5
  $region4: #{tile.8} parent=0 // pred_region
    _
  $region5: #{tile.8} parent=0 // pred_fallthru
    _
  %v4 = vld [vmem:[%s0] ss:$0 sm:$0xff]
  %5 = vst [vmem:[%s1] sm:$0xf] %v4

// kernel: tile.9
$region0: #{tile.9}
  %s0 = inlined_call_operand.vmem [shape: f32[4,8], index: 0, kind: input, shape index: {}]
  %s1 = inlined_call_operand.vmem [shape: f32[1,32], index: 1, kind: output, shape index: {}]
  $region1: #{tile.9} parent=0
    #allocation0 [shape = 'u8[4096]{0}', space=vmem, size = 0x1000, scoped, tag = 'scoped mem for output reshape']
    #allocation1 [shape = 'u8[4096]{0}', space=vmem, size = 0x1000, scoped, tag = 'scoped mem for input reshape']
    %s3 = sshllo.u32 0, 4
    %v4 = vld [vmem:[%s0] sm:%s3]
    %5 = vst [vmem:[#allocation1] sm:%s3] %v4
    %v6 = vld [vmem:[#allocation1] sm:$0x1]
    %vm7 = vcmask 64512
    %8 = vst.msk [vmem:[#allocation0] sm:$0x1] %vm7, %v6
    %s9 = scalar_lea.vmem [#allocation1], 3
    %v10 = vld [vmem:[%s9] sm:$0x1]
    %11 = vrot.lane.b32.xlu0 %v10, 24
    %v12 = vpop.permute.xlu0 %11
    %vm13 = vcmask 261312
    %14 = vst.msk [vmem:[#allocation0] sm:$0x1] %vm13, %v12
    %s15 = scalar_lea.vmem [#allocation1], 2
    %v16 = vld [vmem:[%s15] sm:$0x1]
    %17 = vrot.lane.b32.xlu0 %v16, 16
    %v18 = vpop.permute.xlu0 %17
    %vm19 = vcmask 195712
    %20 = vst.msk [vmem:[#allocation0] sm:$0x1] %vm19, %v18
    %s21 = scalar_lea.vmem [#allocation1], 1
    %v22 = vld [vmem:[%s21] sm:$0x1]
    %23 = vrot.lane.b32.xlu0 %v22, 8
    %v24 = vpop.permute.xlu0 %23
    %vm25 = vcmask 130112
    %26 = vst.msk [vmem:[#allocation0] sm:$0x1] %vm25, %v24
    %s28 = sshllo.u32 0, 1
    %v30 = vld [vmem:[#allocation0] sm:%s28]
    %s31 = sshllo.u32 0, 1
    %32 = vst [vmem:[%s1] sm:%s31] %v30

// kernel: upsample_forward.1
$region0: #{upsample_forward.1}
  #allocation0 [shape = 'u32[]', space=smem, size = 0x4, offset = 0x4, fixed_abs, tag = 'smem constant byte address 0x4 - core index']
  #allocation1 [shape = 'u32[144,128]{1,0:T(1,128)}', space=vmem, size = 0x12000, scoped, tag = 'internal scratch']
  #allocation2 [shape = 'bf16[10,16,12]{2,1,0:T(16,128)(2,1)}', space=vmem, size = 0xa000, scoped, tag = 'scratch operand']
  %s0 = inlined_call_operand.vmem [shape: bf16[2,18,18,4], index: 0, kind: input, shape index: {}]
  %s1 = inlined_call_operand.vmem [shape: bf16[3,12,32], index: 1, kind: input, shape index: {}]
  %s2 = inlined_call_operand.vmem [shape: f32[1,32], index: 2, kind: input, shape index: {}]
  %s3 = inlined_call_operand.vmem [shape: bf16[2,16,2,16,16], index: 3, kind: output, shape index: {}]
  %s4 = sld [smem:[#allocation0]]
  $region45: #{upsample_forward.1} parent=0
    _
  %s6 = ssub.s32 1, %s4
  %s7 = scalar_select 0, %s6, %s4
  loop: start=0, step=1, limit=6
  $region2: #{upsample_forward.1} parent=0 // loop_pre_header
    _
  $region3: #{upsample_forward.1} parent=0 // loop_header
    %s9 = sphi 0, %s13
    %p10 = scmp.ge.s32.totalorder %s9, 6
    %s16 = sphi 0, %s28
    %s17 = sphi 0, %s24
    %s18 = sphi 0, %s16
    %s19 = sphi 0, %s17
    %s20 = sphi 0, %s18
    %s21 = sphi 0, %s19
    %s31 = sphi 0, %s33
    %s34 = sphi 0, %s31
    %s35 = sphi 0, %s34
    %s51 = sphi 0, %s35
    %s55 = sphi 0, %s55
    %s57 = sphi 0, %s55
    %s58 = sphi 0, %s57
    %s72 = sphi 0, %s58
    %s76 = sphi 0, %s76
    %s78 = sphi 0, %s76
    %s79 = sphi 0, %s78
    %s93 = sphi 0, %s79
    %s101 = sphi 0, %s103
    %s104 = sphi 0, %s101
    %s105 = sphi 0, %s104
    %s121 = sphi 0, %s105
  $region4: #{upsample_forward.1} parent=0 // loop_header_branch
    %12 = sbr.rel (%p10) target = $region8
  $region5: #{upsample_forward.1} parent=0 // loop_body
    %s14 = ssub.s32 %s9, 1
    %s15 = ssub.s32 %s9, 2
    %s22 = sadd.s32 1, %s17
    %p23 = scmp.ge.s32.totalorder %s22, 2
    %s24 = scalar_select %p23, 0, %s22
    %s25 = sadd.s32 1, %s16
    %s26 = scalar_select %p23, %s25, %s16
    %p27 = scmp.ge.s32.totalorder %s26, 2
    %s28 = scalar_select %p27, 0, %s26
    %s29 = ssub.s32 %s16, %s28
    %p30 = scmp.eq.s32.totalorder %s29, 0
    %s32 = sadd.s32 %s31, 1
    %s33 = scalar_select %p30, %s31, %s32
    %p36 = pneg %p30
    %p37 = scmp.eq.s32.totalorder %s9, 3
    %p38 = por %p36, %p37
    %p39 = scmp.ne.s32.totalorder %s31, %s34
    %p40 = scmp.eq.s32.totalorder %s9, 0
    %p41 = por %p39, %p40
    %p42 = scmp.ne.s32.totalorder %s31, %s34
    %p43 = scmp.eq.s32.totalorder %s14, 3
    %p44 = por %p42, %p43
    %p45 = scmp.ne.s32.totalorder %s34, %s35
    %p46 = scmp.eq.s32.totalorder %s14, 0
    %p47 = por %p45, %p46
    %p48 = scmp.ne.s32.totalorder %s34, %s35
    %p49 = scmp.eq.s32.totalorder %s15, 3
    %p50 = por %p48, %p49
    %p52 = scmp.ne.s32.totalorder %s35, %s51
    %p53 = scmp.eq.s32.totalorder %s15, 0
    %p54 = por %p52, %p53
    %s56 = sadd.s32 %s55, 1
    %p59 = scmp.eq.s32.totalorder %s9, 3
    %p60 = scmp.ne.s32.totalorder %s55, %s57
    %p61 = scmp.eq.s32.totalorder %s9, 0
    %p62 = por %p60, %p61
    %p63 = scmp.ne.s32.totalorder %s55, %s57
    %p64 = scmp.eq.s32.totalorder %s14, 3
    %p65 = por %p63, %p64
    %p66 = scmp.ne.s32.totalorder %s57, %s58
    %p67 = scmp.eq.s32.totalorder %s14, 0
    %p68 = por %p66, %p67
    %p69 = scmp.ne.s32.totalorder %s57, %s58
    %p70 = scmp.eq.s32.totalorder %s15, 3
    %p71 = por %p69, %p70
    %p73 = scmp.ne.s32.totalorder %s58, %s72
    %p74 = scmp.eq.s32.totalorder %s15, 0
    %p75 = por %p73, %p74
    %s77 = sadd.s32 %s76, 1
    %p80 = scmp.eq.s32.totalorder %s9, 3
    %p81 = scmp.ne.s32.totalorder %s76, %s78
    %p82 = scmp.eq.s32.totalorder %s9, 0
    %p83 = por %p81, %p82
    %p84 = scmp.ne.s32.totalorder %s76, %s78
    %p85 = scmp.eq.s32.totalorder %s14, 3
    %p86 = por %p84, %p85
    %p87 = scmp.ne.s32.totalorder %s78, %s79
    %p88 = scmp.eq.s32.totalorder %s14, 0
    %p89 = por %p87, %p88
    %p90 = scmp.ne.s32.totalorder %s78, %s79
    %p91 = scmp.eq.s32.totalorder %s15, 3
    %p92 = por %p90, %p91
    %p94 = scmp.ne.s32.totalorder %s79, %s93
    %p95 = scmp.eq.s32.totalorder %s15, 0
    %p96 = por %p94, %p95
    %s97 = ssub.s32 %s16, %s28
    %s98 = ssub.s32 %s17, %s24
    %s99 = sor.u32 %s97, %s98
    %p100 = scmp.eq.s32.totalorder %s99, 0
    %s102 = sadd.s32 %s101, 1
    %s103 = scalar_select %p100, %s101, %s102
    %p106 = pneg %p100
    %p107 = scmp.eq.s32.totalorder %s9, 3
    %p108 = por %p106, %p107
    %p109 = scmp.ne.s32.totalorder %s101, %s104
    %p110 = scmp.eq.s32.totalorder %s9, 0
    %p111 = por %p109, %p110
    %p112 = scmp.ne.s32.totalorder %s101, %s104
    %p113 = scmp.eq.s32.totalorder %s14, 3
    %p114 = por %p112, %p113
    %p115 = scmp.ne.s32.totalorder %s104, %s105
    %p116 = scmp.eq.s32.totalorder %s14, 0
    %p117 = por %p115, %p116
    %p118 = scmp.ne.s32.totalorder %s104, %s105
    %p119 = scmp.eq.s32.totalorder %s15, 3
    %p120 = por %p118, %p119
    %p122 = scmp.ne.s32.totalorder %s105, %s121
    %p123 = scmp.eq.s32.totalorder %s15, 0
    %p124 = por %p122, %p123
    %p125 = scmp.le.s32.totalorder 1, %s9
    %p126 = scmp.lt.s32.totalorder %s9, 5
    %p127 = pnand %p125, %p126
    %p128 = pneg %p127
    // Predicated region
    $region9: #{upsample_forward.1} parent=5 // pred_check
      _
    $region10: #{upsample_forward.1} parent=5 // pred_check_branch
      %130 = sbr.rel (%p127) target = $region12
    $region11: #{upsample_forward.1} parent=5 // pred_region
      %s131 = ssub.s32 %s9, 1
      // Predicated region
      $region13: #{upsample_forward.1} parent=11 // pred_check
        %p132 = pneg %p47
      $region14: #{upsample_forward.1} parent=11 // pred_check_branch
        %134 = sbr.rel (%p132) target = $region16
      $region15: #{upsample_forward.1} parent=11 // pred_region
        %p135 = scmp.lt.s32.totalorder %s18, 1
        %s136 = scalar_select %p135, %s18, 1
        %s137 = smul.addr %s136, 54
        %s138 = smul.addr %s137, 4
        %s139 = scalar_lea.vmem %s0, %s138
      $region16: #{upsample_forward.1} parent=11 // pred_fallthru
        _
      // Predicated region
      $region17: #{upsample_forward.1} parent=11 // pred_check
        %p140 = pneg %p68
      $region18: #{upsample_forward.1} parent=11 // pred_check_branch
        %142 = sbr.rel (%p140) target = $region20
      $region19: #{upsample_forward.1} parent=11 // pred_region
        _
      $region20: #{upsample_forward.1} parent=11 // pred_fallthru
        _
      // Predicated region
      $region21: #{upsample_forward.1} parent=11 // pred_check
        %p143 = pneg %p89
      $region22: #{upsample_forward.1} parent=11 // pred_check_branch
        %145 = sbr.rel (%p143) target = $region24
      $region23: #{upsample_forward.1} parent=11 // pred_region
        _
      $region24: #{upsample_forward.1} parent=11 // pred_fallthru
        _
    $region12: #{upsample_forward.1} parent=5 // pred_fallthru
      _
    %p146 = scmp.lt.s32.totalorder %s9, 4
    // Predicated region
    $region25: #{upsample_forward.1} parent=5 // pred_check
      %p147 = pneg %p146
    $region26: #{upsample_forward.1} parent=5 // pred_check_branch
      %149 = sbr.rel (%p147) target = $region28
    $region27: #{upsample_forward.1} parent=5 // pred_region
      _
    $region28: #{upsample_forward.1} parent=5 // pred_fallthru
      _
    %p150 = scmp.le.s32.totalorder 1, %s9
    %p151 = scmp.lt.s32.totalorder %s9, 5
    %p152 = pnand %p150, %p151
    %p153 = pneg %p152
    // Predicated region
    $region29: #{upsample_forward.1} parent=5 // pred_check
      _
    $region30: #{upsample_forward.1} parent=5 // pred_check_branch
      %155 = sbr.rel (%p152) target = $region32
    $region31: #{upsample_forward.1} parent=5 // pred_region
      %s156 = ssub.s32 %s9, 1
      %p157 = scmp.lt.s32.totalorder %s18, 1
      %s158 = scalar_select %p157, %s18, 1
      %s159 = smul.addr %s158, 54
      %s160 = smul.addr %s159, 4
      %s161 = scalar_lea.vmem %s0, %s160
      %p162 = pneg %p47
      %p163 = pneg %p44
      %p164 = pneg %p68
      %p165 = pneg %p65
      %p166 = pneg %p89
      %p167 = pneg %p86
      %p168 = pneg %p117
      %p169 = pneg %p114
      %s170 = smul.u32 8, %s19
      %p171 = scmp.lt.s32.totalorder %s18, 1
      %s172 = scalar_select %p171, %s18, 1
      %p173 = scmp.lt.s32.totalorder %s170, 15
      %s174 = scalar_select %p173, %s170, 15
      %s175 = smul.addr %s174, 4
      %s176 = smul.addr %s172, 64
      %s177 = sadd.s32 %s175, %s176
      %s178 = smul.addr %s177, 4
      %s179 = scalar_lea.vmem %s3, %s178
      %p180 = scmp.lt.s32.totalorder %s18, 1
      %s181 = scalar_select %p180, %s18, 1
      %s182 = smul.addr %s181, 54
      %s183 = smul.addr %s182, 4
      %s184 = scalar_lea.vmem %s0, %s183
      %s185 = smul.u32 8, %s19
      %p186 = scmp.lt.s32.totalorder %s18, 1
      %s187 = scalar_select %p186, %s18, 1
      %p188 = scmp.lt.s32.totalorder %s185, 15
      %s189 = scalar_select %p188, %s185, 15
      %s190 = smul.addr %s189, 4
      %s191 = smul.addr %s187, 64
      %s192 = sadd.s32 %s190, %s191
      %s193 = smul.addr %s192, 4
      %s194 = scalar_lea.vmem %s3, %s193
      %s195 = smul.u32 8, %s19
      %s197 = smul.u32 %s19, 8
      %s198 = smul.u32 %s197, 3
      %s199 = smul.addr %s198, 4
      %s200 = scalar_lea.vmem %s184, %s199
      %v201 = vld [vmem:[%s200] sm:$0xf]
      %v202 = vld [vmem:[%s200 + $0x4] sm:$0xf]
      %v203 = vld [vmem:[%s200 + $0xc] sm:$0xf]
      %v204 = vld [vmem:[%s200 + $0x10] sm:$0xf]
      %v205 = vld [vmem:[%s200 + $0x18] sm:$0xf]
      %v206 = vld [vmem:[%s200 + $0x1c] sm:$0xf]
      %v207 = vld [vmem:[%s200 + $0x24] sm:$0xf]
      %v208 = vld [vmem:[%s200 + $0x28] sm:$0xf]
      %v209 = vld [vmem:[%s200 + $0x30] sm:$0xf]
      %v210 = vld [vmem:[%s200 + $0x34] sm:$0xf]
      %v211 = vld [vmem:[%s200 + $0x3c] sm:$0xf]
      %v212 = vld [vmem:[%s200 + $0x40] sm:$0xf]
      %v213 = vld [vmem:[%s200 + $0x48] sm:$0xf]
      %v214 = vld [vmem:[%s200 + $0x4c] sm:$0xf]
      %v215 = vld [vmem:[%s200 + $0x54] sm:$0xf]
      %v216 = vld [vmem:[%s200 + $0x58] sm:$0xf]
      %v217 = vld [vmem:[%s200 + $0x60] sm:$0xf]
      %v218 = vld [vmem:[%s200 + $0x64] sm:$0xf]
      %v219 = vld [vmem:[%s200 + $0x6c] sm:$0xf]
      %v220 = vld [vmem:[%s200 + $0x70] sm:$0xf]
      %v241 = vunpack.c.l.b16 %v201
      %v242 = vunpack.c.l.b16 %v202
      %v243 = vunpack.c.l.b16 %v203
      %v244 = vunpack.c.l.b16 %v204
      %v245 = vunpack.c.l.b16 %v205
      %v246 = vunpack.c.l.b16 %v206
      %v247 = vunpack.c.l.b16 %v207
      %v248 = vunpack.c.l.b16 %v208
      %v249 = vunpack.c.l.b16 %v209
      %v250 = vunpack.c.l.b16 %v210
      %v251 = vunpack.c.l.b16 %v211
      %v252 = vunpack.c.l.b16 %v212
      %v253 = vunpack.c.l.b16 %v213
      %v254 = vunpack.c.l.b16 %v214
      %v255 = vunpack.c.l.b16 %v215
      %v256 = vunpack.c.l.b16 %v216
      %v257 = vunpack.c.l.b16 %v217
      %v258 = vunpack.c.l.b16 %v218
      %v259 = vunpack.c.l.b16 %v219
      %v260 = vunpack.c.l.b16 %v220
      %v261 = vpack.c.b16 %v242, %v241
      %v262 = vpack.c.b16 %v244, %v243
      %v263 = vpack.c.b16 %v246, %v245
      %v264 = vpack.c.b16 %v248, %v247
      %v265 = vpack.c.b16 %v250, %v249
      %v266 = vpack.c.b16 %v252, %v251
      %v267 = vpack.c.b16 %v254, %v253
      %v268 = vpack.c.b16 %v256, %v255
      %v269 = vpack.c.b16 %v258, %v257
      %v270 = vpack.c.b16 %v260, %v259
      %vm281 = vcmask 31744
      %282 = vst.msk [vmem:[#allocation2] sm:$0xff] %vm281, %v261
      %283 = vst.msk [vmem:[#allocation2 + $0x8] sm:$0xff] %vm281, %v262
      %284 = vst.msk [vmem:[#allocation2 + $0x10] sm:$0xff] %vm281, %v263
      %285 = vst.msk [vmem:[#allocation2 + $0x18] sm:$0xff] %vm281, %v264
      %286 = vst.msk [vmem:[#allocation2 + $0x20] sm:$0xff] %vm281, %v265
      %287 = vst.msk [vmem:[#allocation2 + $0x28] sm:$0xff] %vm281, %v266
      %288 = vst.msk [vmem:[#allocation2 + $0x30] sm:$0xff] %vm281, %v267
      %289 = vst.msk [vmem:[#allocation2 + $0x38] sm:$0xff] %vm281, %v268
      %290 = vst.msk [vmem:[#allocation2 + $0x40] sm:$0xff] %vm281, %v269
      %291 = vst.msk [vmem:[#allocation2 + $0x48] sm:$0xff] %vm281, %v270
      %v292 = vld [vmem:[%s200] sm:$0xf]
      %v293 = vld [vmem:[%s200 + $0x4] sm:$0xf]
      %v294 = vld [vmem:[%s200 + $0x8] sm:$0x1]
      %v295 = vld [vmem:[%s200 + $0xc] sm:$0xf]
      %v296 = vld [vmem:[%s200 + $0x10] sm:$0xf]
      %v297 = vld [vmem:[%s200 + $0x14] sm:$0x1]
      %v298 = vld [vmem:[%s200 + $0x18] sm:$0xf]
      %v299 = vld [vmem:[%s200 + $0x1c] sm:$0xf]
      %v300 = vld [vmem:[%s200 + $0x20] sm:$0x1]
      %v301 = vld [vmem:[%s200 + $0x24] sm:$0xf]
      %v302 = vld [vmem:[%s200 + $0x28] sm:$0xf]
      %v303 = vld [vmem:[%s200 + $0x2c] sm:$0x1]
      %v304 = vld [vmem:[%s200 + $0x30] sm:$0xf]
      %v305 = vld [vmem:[%s200 + $0x34] sm:$0xf]
      %v306 = vld [vmem:[%s200 + $0x38] sm:$0x1]
      %v307 = vld [vmem:[%s200 + $0x3c] sm:$0xf]
      %v308 = vld [vmem:[%s200 + $0x40] sm:$0xf]
      %v309 = vld [vmem:[%s200 + $0x44] sm:$0x1]
      %v310 = vld [vmem:[%s200 + $0x48] sm:$0xf]
      %v311 = vld [vmem:[%s200 + $0x4c] sm:$0xf]
      %v312 = vld [vmem:[%s200 + $0x50] sm:$0x1]
      %v313 = vld [vmem:[%s200 + $0x54] sm:$0xf]
      %v314 = vld [vmem:[%s200 + $0x58] sm:$0xf]
      %v315 = vld [vmem:[%s200 + $0x5c] sm:$0x1]
      %v316 = vld [vmem:[%s200 + $0x60] sm:$0xf]
      %v317 = vld [vmem:[%s200 + $0x64] sm:$0xf]
      %v318 = vld [vmem:[%s200 + $0x68] sm:$0x1]
      %v319 = vld [vmem:[%s200 + $0x6c] sm:$0xf]
      %v320 = vld [vmem:[%s200 + $0x70] sm:$0xf]
      %v321 = vld [vmem:[%s200 + $0x74] sm:$0x1]
      %v352 = vunpack.c.l.b16 %v292
      %v353 = vunpack.c.l.b16 %v293
      %v354 = vunpack.c.l.b16 %v294
      %v355 = vunpack.c.l.b16 %v295
      %v356 = vunpack.c.l.b16 %v296
      %v357 = vunpack.c.l.b16 %v297
      %v358 = vunpack.c.l.b16 %v298
      %v359 = vunpack.c.l.b16 %v299
      %v360 = vunpack.c.l.b16 %v300
      %v361 = vunpack.c.l.b16 %v301
      %v362 = vunpack.c.l.b16 %v302
      %v363 = vunpack.c.l.b16 %v303
      %v364 = vunpack.c.l.b16 %v304
      %v365 = vunpack.c.l.b16 %v305
      %v366 = vunpack.c.l.b16 %v306
      %v367 = vunpack.c.l.b16 %v307
      %v368 = vunpack.c.l.b16 %v308
      %v369 = vunpack.c.l.b16 %v309
      %v370 = vunpack.c.l.b16 %v310
      %v371 = vunpack.c.l.b16 %v311
      %v372 = vunpack.c.l.b16 %v312
      %v373 = vunpack.c.l.b16 %v313
      %v374 = vunpack.c.l.b16 %v314
      %v375 = vunpack.c.l.b16 %v315
      %v376 = vunpack.c.l.b16 %v316
      %v377 = vunpack.c.l.b16 %v317
      %v378 = vunpack.c.l.b16 %v318
      %v379 = vunpack.c.l.b16 %v319
      %v380 = vunpack.c.l.b16 %v320
      %v381 = vunpack.c.l.b16 %v321
      %v382 = vpack.c.b16 %v353, %v352
      %v383 = vpack.c.b16 %v354, %v354
      %v384 = vpack.c.b16 %v356, %v355
      %v385 = vpack.c.b16 %v357, %v357
      %v386 = vpack.c.b16 %v359, %v358
      %v387 = vpack.c.b16 %v360, %v360
      %v388 = vpack.c.b16 %v362, %v361
      %v389 = vpack.c.b16 %v363, %v363
      %v390 = vpack.c.b16 %v365, %v364
      %v391 = vpack.c.b16 %v366, %v366
      %v392 = vpack.c.b16 %v368, %v367
      %v393 = vpack.c.b16 %v369, %v369
      %v394 = vpack.c.b16 %v371, %v370
      %v395 = vpack.c.b16 %v372, %v372
      %v396 = vpack.c.b16 %v374, %v373
      %v397 = vpack.c.b16 %v375, %v375
      %v398 = vpack.c.b16 %v377, %v376
      %v399 = vpack.c.b16 %v378, %v378
      %v400 = vpack.c.b16 %v380, %v379
      %v401 = vpack.c.b16 %v381, %v381
      %vm402 = vsmask.f32 7424
      %v404 = vshrl.u32 %v382, 16
      %v406 = vshll.u32 %v382, 16
      %v408 = vrot.slane %v406, 1
      %v409 = vor.u32 %v404, %v408
      %v411 = vshll.u32 %v383, 16
      %v413 = vrot.slane %v411, 1
      %v414 = vsel %vm402, %v409, %v413
      %v416 = vshrl.u32 %v384, 16
      %v418 = vshll.u32 %v384, 16
      %v420 = vrot.slane %v418, 1
      %v421 = vor.u32 %v416, %v420
      %v423 = vshll.u32 %v385, 16
      %v425 = vrot.slane %v423, 1
      %v426 = vsel %vm402, %v421, %v425
      %v428 = vshrl.u32 %v386, 16
      %v430 = vshll.u32 %v386, 16
      %v432 = vrot.slane %v430, 1
      %v433 = vor.u32 %v428, %v432
      %v435 = vshll.u32 %v387, 16
      %v437 = vrot.slane %v435, 1
      %v438 = vsel %vm402, %v433, %v437
      %v440 = vshrl.u32 %v388, 16
      %v442 = vshll.u32 %v388, 16
      %v444 = vrot.slane %v442, 1
      %v445 = vor.u32 %v440, %v444
      %v447 = vshll.u32 %v389, 16
      %v449 = vrot.slane %v447, 1
      %v450 = vsel %vm402, %v445, %v449
      %v452 = vshrl.u32 %v390, 16
      %v454 = vshll.u32 %v390, 16
      %v456 = vrot.slane %v454, 1
      %v457 = vor.u32 %v452, %v456
      %v459 = vshll.u32 %v391, 16
      %v461 = vrot.slane %v459, 1
      %v462 = vsel %vm402, %v457, %v461
      %v464 = vshrl.u32 %v392, 16
      %v466 = vshll.u32 %v392, 16
      %v468 = vrot.slane %v466, 1
      %v469 = vor.u32 %v464, %v468
      %v471 = vshll.u32 %v393, 16
      %v473 = vrot.slane %v471, 1
      %v474 = vsel %vm402, %v469, %v473
      %v476 = vshrl.u32 %v394, 16
      %v478 = vshll.u32 %v394, 16
      %v480 = vrot.slane %v478, 1
      %v481 = vor.u32 %v476, %v480
      %v483 = vshll.u32 %v395, 16
      %v485 = vrot.slane %v483, 1
      %v486 = vsel %vm402, %v481, %v485
      %v488 = vshrl.u32 %v396, 16
      %v490 = vshll.u32 %v396, 16
      %v492 = vrot.slane %v490, 1
      %v493 = vor.u32 %v488, %v492
      %v495 = vshll.u32 %v397, 16
      %v497 = vrot.slane %v495, 1
      %v498 = vsel %vm402, %v493, %v497
      %v500 = vshrl.u32 %v398, 16
      %v502 = vshll.u32 %v398, 16
      %v504 = vrot.slane %v502, 1
      %v505 = vor.u32 %v500, %v504
      %v507 = vshll.u32 %v399, 16
      %v509 = vrot.slane %v507, 1
      %v510 = vsel %vm402, %v505, %v509
      %v512 = vshrl.u32 %v400, 16
      %v514 = vshll.u32 %v400, 16
      %v516 = vrot.slane %v514, 1
      %v517 = vor.u32 %v512, %v516
      %v519 = vshll.u32 %v401, 16
      %v521 = vrot.slane %v519, 1
      %v522 = vsel %vm402, %v517, %v521
      %523 = vrot.lane.b32.xlu0 %v414, 4
      %v524 = vpop.permute.xlu0 %523
      %525 = vrot.lane.b32.xlu0 %v426, 4
      %v526 = vpop.permute.xlu0 %525
      %527 = vrot.lane.b32.xlu0 %v438, 4
      %v528 = vpop.permute.xlu0 %527
      %529 = vrot.lane.b32.xlu0 %v450, 4
      %v530 = vpop.permute.xlu0 %529
      %531 = vrot.lane.b32.xlu0 %v462, 4
      %v532 = vpop.permute.xlu0 %531
      %533 = vrot.lane.b32.xlu0 %v474, 4
      %v534 = vpop.permute.xlu0 %533
      %535 = vrot.lane.b32.xlu0 %v486, 4
      %v536 = vpop.permute.xlu0 %535
      %537 = vrot.lane.b32.xlu0 %v498, 4
      %v538 = vpop.permute.xlu0 %537
      %539 = vrot.lane.b32.xlu0 %v510, 4
      %v540 = vpop.permute.xlu0 %539
      %541 = vrot.lane.b32.xlu0 %v522, 4
      %v542 = vpop.permute.xlu0 %541
      %vm553 = vcmask 64544
      %554 = vst.msk [vmem:[#allocation2] sm:$0xff] %vm553, %v524
      %555 = vst.msk [vmem:[#allocation2 + $0x8] sm:$0xff] %vm553, %v526
      %556 = vst.msk [vmem:[#allocation2 + $0x10] sm:$0xff] %vm553, %v528
      %557 = vst.msk [vmem:[#allocation2 + $0x18] sm:$0xff] %vm553, %v530
      %558 = vst.msk [vmem:[#allocation2 + $0x20] sm:$0xff] %vm553, %v532
      %559 = vst.msk [vmem:[#allocation2 + $0x28] sm:$0xff] %vm553, %v534
      %560 = vst.msk [vmem:[#allocation2 + $0x30] sm:$0xff] %vm553, %v536
      %561 = vst.msk [vmem:[#allocation2 + $0x38] sm:$0xff] %vm553, %v538
      %562 = vst.msk [vmem:[#allocation2 + $0x40] sm:$0xff] %vm553, %v540
      %563 = vst.msk [vmem:[#allocation2 + $0x48] sm:$0xff] %vm553, %v542
      %v564 = vld [vmem:[%s200] sm:$0xe]
      %v565 = vld [vmem:[%s200 + $0x4] sm:$0xf]
      %v566 = vld [vmem:[%s200 + $0x8] sm:$0x1]
      %v567 = vld [vmem:[%s200 + $0xc] sm:$0xe]
      %v568 = vld [vmem:[%s200 + $0x10] sm:$0xf]
      %v569 = vld [vmem:[%s200 + $0x14] sm:$0x1]
      %v570 = vld [vmem:[%s200 + $0x18] sm:$0xe]
      %v571 = vld [vmem:[%s200 + $0x1c] sm:$0xf]
      %v572 = vld [vmem:[%s200 + $0x20] sm:$0x1]
      %v573 = vld [vmem:[%s200 + $0x24] sm:$0xe]
      %v574 = vld [vmem:[%s200 + $0x28] sm:$0xf]
      %v575 = vld [vmem:[%s200 + $0x2c] sm:$0x1]
      %v576 = vld [vmem:[%s200 + $0x30] sm:$0xe]
      %v577 = vld [vmem:[%s200 + $0x34] sm:$0xf]
      %v578 = vld [vmem:[%s200 + $0x38] sm:$0x1]
      %v579 = vld [vmem:[%s200 + $0x3c] sm:$0xe]
      %v580 = vld [vmem:[%s200 + $0x40] sm:$0xf]
      %v581 = vld [vmem:[%s200 + $0x44] sm:$0x1]
      %v582 = vld [vmem:[%s200 + $0x48] sm:$0xe]
      %v583 = vld [vmem:[%s200 + $0x4c] sm:$0xf]
      %v584 = vld [vmem:[%s200 + $0x50] sm:$0x1]
      %v585 = vld [vmem:[%s200 + $0x54] sm:$0xe]
      %v586 = vld [vmem:[%s200 + $0x58] sm:$0xf]
      %v587 = vld [vmem:[%s200 + $0x5c] sm:$0x1]
      %v588 = vld [vmem:[%s200 + $0x60] sm:$0xe]
      %v589 = vld [vmem:[%s200 + $0x64] sm:$0xf]
      %v590 = vld [vmem:[%s200 + $0x68] sm:$0x1]
      %v591 = vld [vmem:[%s200 + $0x6c] sm:$0xe]
      %v592 = vld [vmem:[%s200 + $0x70] sm:$0xf]
      %v593 = vld [vmem:[%s200 + $0x74] sm:$0x1]
      %v624 = vunpack.c.l.b16 %v564
      %v625 = vunpack.c.l.b16 %v565
      %v626 = vunpack.c.l.b16 %v566
      %v627 = vunpack.c.l.b16 %v567
      %v628 = vunpack.c.l.b16 %v568
      %v629 = vunpack.c.l.b16 %v569
      %v630 = vunpack.c.l.b16 %v570
      %v631 = vunpack.c.l.b16 %v571
      %v632 = vunpack.c.l.b16 %v572
      %v633 = vunpack.c.l.b16 %v573
      %v634 = vunpack.c.l.b16 %v574
      %v635 = vunpack.c.l.b16 %v575
      %v636 = vunpack.c.l.b16 %v576
      %v637 = vunpack.c.l.b16 %v577
      %v638 = vunpack.c.l.b16 %v578
      %v639 = vunpack.c.l.b16 %v579
      %v640 = vunpack.c.l.b16 %v580
      %v641 = vunpack.c.l.b16 %v581
      %v642 = vunpack.c.l.b16 %v582
      %v643 = vunpack.c.l.b16 %v583
      %v644 = vunpack.c.l.b16 %v584
      %v645 = vunpack.c.l.b16 %v585
      %v646 = vunpack.c.l.b16 %v586
      %v647 = vunpack.c.l.b16 %v587
      %v648 = vunpack.c.l.b16 %v588
      %v649 = vunpack.c.l.b16 %v589
      %v650 = vunpack.c.l.b16 %v590
      %v651 = vunpack.c.l.b16 %v591
      %v652 = vunpack.c.l.b16 %v592
      %v653 = vunpack.c.l.b16 %v593
      %v654 = vpack.c.b16 %v625, %v624
      %v655 = vpack.c.b16 %v626, %v626
      %v656 = vpack.c.b16 %v628, %v627
      %v657 = vpack.c.b16 %v629, %v629
      %v658 = vpack.c.b16 %v631, %v630
      %v659 = vpack.c.b16 %v632, %v632
      %v660 = vpack.c.b16 %v634, %v633
      %v661 = vpack.c.b16 %v635, %v635
      %v662 = vpack.c.b16 %v637, %v636
      %v663 = vpack.c.b16 %v638, %v638
      %v664 = vpack.c.b16 %v640, %v639
      %v665 = vpack.c.b16 %v641, %v641
      %v666 = vpack.c.b16 %v643, %v642
      %v667 = vpack.c.b16 %v644, %v644
      %v668 = vpack.c.b16 %v646, %v645
      %v669 = vpack.c.b16 %v647, %v647
      %v670 = vpack.c.b16 %v649, %v648
      %v671 = vpack.c.b16 %v650, %v650
      %v672 = vpack.c.b16 %v652, %v651
      %v673 = vpack.c.b16 %v653, %v653
      %vm674 = vcmask 1046528
      %v675 = vrot.slane %v654, 1
      %v676 = vrot.slane %v655, 1
      %v677 = vsel %vm674, %v675, %v676
      %v678 = vrot.slane %v656, 1
      %v679 = vrot.slane %v657, 1
      %v680 = vsel %vm674, %v678, %v679
      %v681 = vrot.slane %v658, 1
      %v682 = vrot.slane %v659, 1
      %v683 = vsel %vm674, %v681, %v682
      %v684 = vrot.slane %v660, 1
      %v685 = vrot.slane %v661, 1
      %v686 = vsel %vm674, %v684, %v685
      %v687 = vrot.slane %v662, 1
      %v688 = vrot.slane %v663, 1
      %v689 = vsel %vm674, %v687, %v688
      %v690 = vrot.slane %v664, 1
      %v691 = vrot.slane %v665, 1
      %v692 = vsel %vm674, %v690, %v691
      %v693 = vrot.slane %v666, 1
      %v694 = vrot.slane %v667, 1
      %v695 = vsel %vm674, %v693, %v694
      %v696 = vrot.slane %v668, 1
      %v697 = vrot.slane %v669, 1
      %v698 = vsel %vm674, %v696, %v697
      %v699 = vrot.slane %v670, 1
      %v700 = vrot.slane %v671, 1
      %v701 = vsel %vm674, %v699, %v700
      %v702 = vrot.slane %v672, 1
      %v703 = vrot.slane %v673, 1
      %v704 = vsel %vm674, %v702, %v703
      %705 = vrot.lane.b32.xlu0 %v677, 8
      %v706 = vpop.permute.xlu0 %705
      %707 = vrot.lane.b32.xlu0 %v680, 8
      %v708 = vpop.permute.xlu0 %707
      %709 = vrot.lane.b32.xlu0 %v683, 8
      %v710 = vpop.permute.xlu0 %709
      %711 = vrot.lane.b32.xlu0 %v686, 8
      %v712 = vpop.permute.xlu0 %711
      %713 = vrot.lane.b32.xlu0 %v689, 8
      %v714 = vpop.permute.xlu0 %713
      %715 = vrot.lane.b32.xlu0 %v692, 8
      %v716 = vpop.permute.xlu0 %715
      %717 = vrot.lane.b32.xlu0 %v695, 8
      %v718 = vpop.permute.xlu0 %717
      %719 = vrot.lane.b32.xlu0 %v698, 8
      %v720 = vpop.permute.xlu0 %719
      %721 = vrot.lane.b32.xlu0 %v701, 8
      %v722 = vpop.permute.xlu0 %721
      %723 = vrot.lane.b32.xlu0 %v704, 8
      %v724 = vpop.permute.xlu0 %723
      %vm735 = vcmask 97344
      %736 = vst.msk [vmem:[#allocation2] sm:$0xff] %vm735, %v706
      %737 = vst.msk [vmem:[#allocation2 + $0x8] sm:$0xff] %vm735, %v708
      %738 = vst.msk [vmem:[#allocation2 + $0x10] sm:$0xff] %vm735, %v710
      %739 = vst.msk [vmem:[#allocation2 + $0x18] sm:$0xff] %vm735, %v712
      %740 = vst.msk [vmem:[#allocation2 + $0x20] sm:$0xff] %vm735, %v714
      %741 = vst.msk [vmem:[#allocation2 + $0x28] sm:$0xff] %vm735, %v716
      %742 = vst.msk [vmem:[#allocation2 + $0x30] sm:$0xff] %vm735, %v718
      %743 = vst.msk [vmem:[#allocation2 + $0x38] sm:$0xff] %vm735, %v720
      %744 = vst.msk [vmem:[#allocation2 + $0x40] sm:$0xff] %vm735, %v722
      %745 = vst.msk [vmem:[#allocation2 + $0x48] sm:$0xff] %vm735, %v724
      %v746 = vld [vmem:[%s2] sm:$0x1]
      %v747 = vld [vmem:[#allocation2] sm:$0xff]
      %v748 = vld [vmem:[#allocation2 + $0x8] sm:$0xff]
      %v749 = vld [vmem:[#allocation2 + $0x10] sm:$0xff]
      %v750 = vld [vmem:[#allocation2 + $0x18] sm:$0xff]
      %v751 = vld [vmem:[#allocation2 + $0x20] sm:$0xff]
      %v752 = vld [vmem:[#allocation2 + $0x28] sm:$0xff]
      %v753 = vld [vmem:[#allocation2 + $0x30] sm:$0xff]
      %v754 = vld [vmem:[#allocation2 + $0x38] sm:$0xff]
      %v755 = vld [vmem:[%s1] sm:$0xf]
      %v756 = vld [vmem:[%s1 + $0x4] sm:$0x3]
      %v759 = vunpack.c.l.b16 %v755
      %v760 = vunpack.c.l.b16 %v756
      %v761 = vpack.c.b16 %v760, %v759
      %vm762 = vcmask 97280
      %v764 = vsel %vm762, %v747, 0
      %v767 = vsel %vm762, %v748, 0
      %v770 = vsel %vm762, %v749, 0
      %v773 = vsel %vm762, %v750, 0
      %v776 = vsel %vm762, %v751, 0
      %v779 = vsel %vm762, %v752, 0
      %v782 = vsel %vm762, %v753, 0
      %v785 = vsel %vm762, %v754, 0
      %vm787 = vcmask 1045504
      %v789 = vsel %vm787, %v761, 0
      %791 = vmatprep.subr.bf16.mxu0 0
      %792 = vmatpush1.bf16.msra.mxu0 %v789
      %793 = vmatprep.subr.bf16.mxu0 0
      %794 = vmatpush1.bf16.msra.mxu0 0
      %795 = vmatprep.subr.bf16.mxu0 0
      %796 = vmatpush1.bf16.msra.mxu0 0
      %797 = vmatprep.subr.bf16.mxu0 0
      %798 = vmatpush1.bf16.msra.mxu0 0
      %799 = vmatprep.subr.bf16.mxu0 0
      %800 = vmatpush1.bf16.msra.mxu0 0
      %801 = vmatprep.subr.bf16.mxu0 0
      %802 = vmatpush1.bf16.msra.mxu0 0
      %803 = vmatprep.subr.bf16.mxu0 0
      %804 = vmatpush1.bf16.msra.mxu0 0
      %805 = vmatprep.subr.bf16.mxu0 0
      %806 = vmatpush1.bf16.msra.mxu0 0
      %807 = vmatprep.subr.bf16.mxu0 0
      %808 = vmatpush1.bf16.msra.mxu0 0
      %809 = vmatprep.subr.bf16.mxu0 0
      %810 = vmatpush1.bf16.msra.mxu0 0
      %811 = vmatprep.subr.bf16.mxu0 0
      %812 = vmatpush1.bf16.msra.mxu0 0
      %813 = vmatprep.subr.bf16.mxu0 0
      %814 = vmatpush1.bf16.msra.mxu0 0
      %815 = vmatprep.subr.bf16.mxu0 0
      %816 = vmatpush1.bf16.msra.mxu0 0
      %817 = vmatprep.subr.bf16.mxu0 0
      %818 = vmatpush1.bf16.msra.mxu0 0
      %819 = vmatprep.subr.bf16.mxu0 0
      %820 = vmatpush1.bf16.msra.mxu0 0
      %821 = vmatprep.subr.bf16.mxu0 0
      %822 = vmatpush1.bf16.msra.mxu0 0
      %823 = vmatprep.mubr.bf16.mxu0 0
      %824 = vmatmul.mubr.bf16.gmra.mrb[0].mxu0 %v764
      %v825 = vpop.f32.mrb[0].mxu0
      %v826 = vadd.f32 0.0, %v825
      %v827 = vpop.f32.mrb[0].mxu0
      %v828 = vpop.f32.mrb[0].mxu0
      %v829 = vadd.f32 0.0, %v828
      %v830 = vpop.f32.mrb[0].mxu0
      %831 = vmatprep.mubr.bf16.mxu0 0
      %832 = vmatmul.mubr.bf16.gmra.mrb[0].mxu0 %v767
      %v833 = vpop.f32.mrb[0].mxu0
      %v834 = vadd.f32 0.0, %v833
      %v835 = vpop.f32.mrb[0].mxu0
      %v836 = vpop.f32.mrb[0].mxu0
      %v837 = vadd.f32 0.0, %v836
      %v838 = vpop.f32.mrb[0].mxu0
      %839 = vmatprep.mubr.bf16.mxu0 0
      %840 = vmatmul.mubr.bf16.gmra.mrb[0].mxu0 %v770
      %v841 = vpop.f32.mrb[0].mxu0
      %v842 = vadd.f32 0.0, %v841
      %v843 = vpop.f32.mrb[0].mxu0
      %v844 = vpop.f32.mrb[0].mxu0
      %v845 = vadd.f32 0.0, %v844
      %v846 = vpop.f32.mrb[0].mxu0
      %847 = vmatprep.mubr.bf16.mxu0 0
      %848 = vmatmul.mubr.bf16.gmra.mrb[0].mxu0 %v773
      %v849 = vpop.f32.mrb[0].mxu0
      %v850 = vadd.f32 0.0, %v849
      %v851 = vpop.f32.mrb[0].mxu0
      %v852 = vpop.f32.mrb[0].mxu0
      %v853 = vadd.f32 0.0, %v852
      %v854 = vpop.f32.mrb[0].mxu0
      %855 = vmatprep.mubr.bf16.mxu0 0
      %856 = vmatmul.mubr.bf16.gmra.mrb[0].mxu0 %v776
      %v857 = vpop.f32.mrb[0].mxu0
      %v858 = vadd.f32 0.0, %v857
      %v859 = vpop.f32.mrb[0].mxu0
      %v860 = vpop.f32.mrb[0].mxu0
      %v861 = vadd.f32 0.0, %v860
      %v862 = vpop.f32.mrb[0].mxu0
      %863 = vmatprep.mubr.bf16.mxu0 0
      %864 = vmatmul.mubr.bf16.gmra.mrb[0].mxu0 %v779
      %v865 = vpop.f32.mrb[0].mxu0
      %v866 = vadd.f32 0.0, %v865
      %v867 = vpop.f32.mrb[0].mxu0
      %v868 = vpop.f32.mrb[0].mxu0
      %v869 = vadd.f32 0.0, %v868
      %v870 = vpop.f32.mrb[0].mxu0
      %871 = vmatprep.mubr.bf16.mxu0 0
      %872 = vmatmul.mubr.bf16.gmra.mrb[0].mxu0 %v782
      %v873 = vpop.f32.mrb[0].mxu0
      %v874 = vadd.f32 0.0, %v873
      %v875 = vpop.f32.mrb[0].mxu0
      %v876 = vpop.f32.mrb[0].mxu0
      %v877 = vadd.f32 0.0, %v876
      %v878 = vpop.f32.mrb[0].mxu0
      %879 = vmatprep.mubr.bf16.mxu0 0
      %880 = vmatmul.mubr.bf16.gmra.mrb[0].mxu0 %v785
      %v881 = vpop.f32.mrb[0].mxu0
      %v882 = vadd.f32 0.0, %v881
      %v883 = vpop.f32.mrb[0].mxu0
      %v884 = vpop.f32.mrb[0].mxu0
      %v885 = vadd.f32 0.0, %v884
      %v886 = vpop.f32.mrb[0].mxu0
      %887 = vdwg.mxu0
      %v889 = vlaneseq
      %v890 = vshrl.u32 %v889, 7
      %v891 = vsub.s32 0, %v890
      %v892 = vrot.slane %v746, %v891
      %v894 = vadd.f32 %v892, %v826
      %v895 = vadd.f32 %v892, %v829
      %v896 = vadd.f32 %v892, %v834
      %v897 = vadd.f32 %v892, %v837
      %v898 = vadd.f32 %v892, %v842
      %v899 = vadd.f32 %v892, %v845
      %v900 = vadd.f32 %v892, %v850
      %v901 = vadd.f32 %v892, %v853
      %v902 = vadd.f32 %v892, %v858
      %v903 = vadd.f32 %v892, %v861
      %v904 = vadd.f32 %v892, %v866
      %v905 = vadd.f32 %v892, %v869
      %v906 = vadd.f32 %v892, %v874
      %v907 = vadd.f32 %v892, %v877
      %v908 = vadd.f32 %v892, %v882
      %v909 = vadd.f32 %v892, %v885
      %s910 = scalar_lea.vmem [#allocation2], 8
      %v911 = vld [vmem:[%s910] sm:$0xff]
      %v912 = vld [vmem:[%s910 + $0x8] sm:$0xff]
      %v913 = vld [vmem:[%s910 + $0x10] sm:$0xff]
      %v914 = vld [vmem:[%s910 + $0x18] sm:$0xff]
      %v915 = vld [vmem:[%s910 + $0x20] sm:$0xff]
      %v916 = vld [vmem:[%s910 + $0x28] sm:$0xff]
      %v917 = vld [vmem:[%s910 + $0x30] sm:$0xff]
      %v918 = vld [vmem:[%s910 + $0x38] sm:$0xff]
      %s919 = scalar_lea.vmem %s1, 8
      %v920 = vld [vmem:[%s919] sm:$0xf]
      %v921 = vld [vmem:[%s919 + $0x4] sm:$0x3]
      %v924 = vunpack.c.l.b16 %v920
      %v925 = vunpack.c.l.b16 %v921
      %v926 = vpack.c.b16 %v925, %v924
      %v928 = vsel %vm762, %v911, 0
      %v931 = vsel %vm762, %v912, 0
      %v934 = vsel %vm762, %v913, 0
      %v937 = vsel %vm762, %v914, 0
      %v940 = vsel %vm762, %v915, 0
      %v943 = vsel %vm762, %v916, 0
      %v946 = vsel %vm762, %v917, 0
      %v949 = vsel %vm762, %v918, 0
      %v952 = vsel %vm787, %v926, 0
      %954 = vmatprep.subr.bf16.mxu0 0
      %955 = vmatpush1.bf16.msra.mxu0 %v952
      %956 = vmatprep.subr.bf16.mxu0 0
      %957 = vmatpush1.bf16.msra.mxu0 0
      %958 = vmatprep.subr.bf16.mxu0 0
      %959 = vmatpush1.bf16.msra.mxu0 0
      %960 = vmatprep.subr.bf16.mxu0 0
      %961 = vmatpush1.bf16.msra.mxu0 0
      %962 = vmatprep.subr.bf16.mxu0 0
      %963 = vmatpush1.bf16.msra.mxu0 0
      %964 = vmatprep.subr.bf16.mxu0 0
      %965 = vmatpush1.bf16.msra.mxu0 0
      %966 = vmatprep.subr.bf16.mxu0 0
      %967 = vmatpush1.bf16.msra.mxu0 0
      %968 = vmatprep.subr.bf16.mxu0 0
      %969 = vmatpush1.bf16.msra.mxu0 0
      %970 = vmatprep.subr.bf16.mxu0 0
      %971 = vmatpush1.bf16.msra.mxu0 0
      %972 = vmatprep.subr.bf16.mxu0 0
      %973 = vmatpush1.bf16.msra.mxu0 0
      %974 = vmatprep.subr.bf16.mxu0 0
      %975 = vmatpush1.bf16.msra.mxu0 0
      %976 = vmatprep.subr.bf16.mxu0 0
      %977 = vmatpush1.bf16.msra.mxu0 0
      %978 = vmatprep.subr.bf16.mxu0 0
      %979 = vmatpush1.bf16.msra.mxu0 0
      %980 = vmatprep.subr.bf16.mxu0 0
      %981 = vmatpush1.bf16.msra.mxu0 0
      %982 = vmatprep.subr.bf16.mxu0 0
      %983 = vmatpush1.bf16.msra.mxu0 0
      %984 = vmatprep.subr.bf16.mxu0 0
      %985 = vmatpush1.bf16.msra.mxu0 0
      %986 = vmatprep.mubr.bf16.mxu0 0
      %987 = vmatmul.mubr.bf16.gmra.mrb[0].mxu0 %v928
      %v988 = vpop.f32.mrb[0].mxu0
      %v989 = vadd.f32 0.0, %v988
      %v990 = vpop.f32.mrb[0].mxu0
      %v991 = vpop.f32.mrb[0].mxu0
      %v992 = vadd.f32 0.0, %v991
      %v993 = vpop.f32.mrb[0].mxu0
      %994 = vmatprep.mubr.bf16.mxu0 0
      %995 = vmatmul.mubr.bf16.gmra.mrb[0].mxu0 %v931
      %v996 = vpop.f32.mrb[0].mxu0
      %v997 = vadd.f32 0.0, %v996
      %v998 = vpop.f32.mrb[0].mxu0
      %v999 = vpop.f32.mrb[0].mxu0
      %v1000 = vadd.f32 0.0, %v999
      %v1001 = vpop.f32.mrb[0].mxu0
      %1002 = vmatprep.mubr.bf16.mxu0 0
      %1003 = vmatmul.mubr.bf16.gmra.mrb[0].mxu0 %v934
      %v1004 = vpop.f32.mrb[0].mxu0
      %v1005 = vadd.f32 0.0, %v1004
      %v1006 = vpop.f32.mrb[0].mxu0
      %v1007 = vpop.f32.mrb[0].mxu0
      %v1008 = vadd.f32 0.0, %v1007
      %v1009 = vpop.f32.mrb[0].mxu0
      %1010 = vmatprep.mubr.bf16.mxu0 0
      %1011 = vmatmul.mubr.bf16.gmra.mrb[0].mxu0 %v937
      %v1012 = vpop.f32.mrb[0].mxu0
      %v1013 = vadd.f32 0.0, %v1012
      %v1014 = vpop.f32.mrb[0].mxu0
      %v1015 = vpop.f32.mrb[0].mxu0
      %v1016 = vadd.f32 0.0, %v1015
      %v1017 = vpop.f32.mrb[0].mxu0
      %1018 = vmatprep.mubr.bf16.mxu0 0
      %1019 = vmatmul.mubr.bf16.gmra.mrb[0].mxu0 %v940
      %v1020 = vpop.f32.mrb[0].mxu0
      %v1021 = vadd.f32 0.0, %v1020
      %v1022 = vpop.f32.mrb[0].mxu0
      %v1023 = vpop.f32.mrb[0].mxu0
      %v1024 = vadd.f32 0.0, %v1023
      %v1025 = vpop.f32.mrb[0].mxu0
      %1026 = vmatprep.mubr.bf16.mxu0 0
      %1027 = vmatmul.mubr.bf16.gmra.mrb[0].mxu0 %v943
      %v1028 = vpop.f32.mrb[0].mxu0
      %v1029 = vadd.f32 0.0, %v1028
      %v1030 = vpop.f32.mrb[0].mxu0
      %v1031 = vpop.f32.mrb[0].mxu0
      %v1032 = vadd.f32 0.0, %v1031
      %v1033 = vpop.f32.mrb[0].mxu0
      %1034 = vmatprep.mubr.bf16.mxu0 0
      %1035 = vmatmul.mubr.bf16.gmra.mrb[0].mxu0 %v946
      %v1036 = vpop.f32.mrb[0].mxu0
      %v1037 = vadd.f32 0.0, %v1036
      %v1038 = vpop.f32.mrb[0].mxu0
      %v1039 = vpop.f32.mrb[0].mxu0
      %v1040 = vadd.f32 0.0, %v1039
      %v1041 = vpop.f32.mrb[0].mxu0
      %1042 = vmatprep.mubr.bf16.mxu0 0
      %1043 = vmatmul.mubr.bf16.gmra.mrb[0].mxu0 %v949
      %v1044 = vpop.f32.mrb[0].mxu0
      %v1045 = vadd.f32 0.0, %v1044
      %v1046 = vpop.f32.mrb[0].mxu0
      %v1047 = vpop.f32.mrb[0].mxu0
      %v1048 = vadd.f32 0.0, %v1047
      %v1049 = vpop.f32.mrb[0].mxu0
      %1050 = vdwg.mxu0
      %v1051 = vadd.f32 %v894, %v989
      %v1052 = vadd.f32 %v895, %v992
      %v1053 = vadd.f32 %v896, %v997
      %v1054 = vadd.f32 %v897, %v1000
      %v1055 = vadd.f32 %v898, %v1005
      %v1056 = vadd.f32 %v899, %v1008
      %v1057 = vadd.f32 %v900, %v1013
      %v1058 = vadd.f32 %v901, %v1016
      %v1059 = vadd.f32 %v902, %v1021
      %v1060 = vadd.f32 %v903, %v1024
      %v1061 = vadd.f32 %v904, %v1029
      %v1062 = vadd.f32 %v905, %v1032
      %v1063 = vadd.f32 %v906, %v1037
      %v1064 = vadd.f32 %v907, %v1040
      %v1065 = vadd.f32 %v908, %v1045
      %v1066 = vadd.f32 %v909, %v1048
      %s1067 = scalar_lea.vmem [#allocation2], 16
      %v1068 = vld [vmem:[%s1067] sm:$0xff]
      %v1069 = vld [vmem:[%s1067 + $0x8] sm:$0xff]
      %v1070 = vld [vmem:[%s1067 + $0x10] sm:$0xff]
      %v1071 = vld [vmem:[%s1067 + $0x18] sm:$0xff]
      %v1072 = vld [vmem:[%s1067 + $0x20] sm:$0xff]
      %v1073 = vld [vmem:[%s1067 + $0x28] sm:$0xff]
      %v1074 = vld [vmem:[%s1067 + $0x30] sm:$0xff]
      %v1075 = vld [vmem:[%s1067 + $0x38] sm:$0xff]
      %s1076 = scalar_lea.vmem %s1, 16
      %v1077 = vld [vmem:[%s1076] sm:$0xf]
      %v1078 = vld [vmem:[%s1076 + $0x4] sm:$0x3]
      %v1081 = vunpack.c.l.b16 %v1077
      %v1082 = vunpack.c.l.b16 %v1078
      %v1083 = vpack.c.b16 %v1082, %v1081
      %v1085 = vsel %vm762, %v1068, 0
      %v1088 = vsel %vm762, %v1069, 0
      %v1091 = vsel %vm762, %v1070, 0
      %v1094 = vsel %vm762, %v1071, 0
      %v1097 = vsel %vm762, %v1072, 0
      %v1100 = vsel %vm762, %v1073, 0
      %v1103 = vsel %vm762, %v1074, 0
      %v1106 = vsel %vm762, %v1075, 0
      %v1109 = vsel %vm787, %v1083, 0
      %1111 = vmatprep.subr.bf16.mxu0 0
      %1112 = vmatpush1.bf16.msra.mxu0 %v1109
      %1113 = vmatprep.subr.bf16.mxu0 0
      %1114 = vmatpush1.bf16.msra.mxu0 0
      %1115 = vmatprep.subr.bf16.mxu0 0
      %1116 = vmatpush1.bf16.msra.mxu0 0
      %1117 = vmatprep.subr.bf16.mxu0 0
      %1118 = vmatpush1.bf16.msra.mxu0 0
      %1119 = vmatprep.subr.bf16.mxu0 0
      %1120 = vmatpush1.bf16.msra.mxu0 0
      %1121 = vmatprep.subr.bf16.mxu0 0
      %1122 = vmatpush1.bf16.msra.mxu0 0
      %1123 = vmatprep.subr.bf16.mxu0 0
      %1124 = vmatpush1.bf16.msra.mxu0 0
      %1125 = vmatprep.subr.bf16.mxu0 0
      %1126 = vmatpush1.bf16.msra.mxu0 0
      %1127 = vmatprep.subr.bf16.mxu0 0
      %1128 = vmatpush1.bf16.msra.mxu0 0
      %1129 = vmatprep.subr.bf16.mxu0 0
      %1130 = vmatpush1.bf16.msra.mxu0 0
      %1131 = vmatprep.subr.bf16.mxu0 0
      %1132 = vmatpush1.bf16.msra.mxu0 0
      %1133 = vmatprep.subr.bf16.mxu0 0
      %1134 = vmatpush1.bf16.msra.mxu0 0
      %1135 = vmatprep.subr.bf16.mxu0 0
      %1136 = vmatpush1.bf16.msra.mxu0 0
      %1137 = vmatprep.subr.bf16.mxu0 0
      %1138 = vmatpush1.bf16.msra.mxu0 0
      %1139 = vmatprep.subr.bf16.mxu0 0
      %1140 = vmatpush1.bf16.msra.mxu0 0
      %1141 = vmatprep.subr.bf16.mxu0 0
      %1142 = vmatpush1.bf16.msra.mxu0 0
      %1143 = vmatprep.mubr.bf16.mxu0 0
      %1144 = vmatmul.mubr.bf16.gmra.mrb[0].mxu0 %v1085
      %v1145 = vpop.f32.mrb[0].mxu0
      %v1146 = vadd.f32 0.0, %v1145
      %v1147 = vpop.f32.mrb[0].mxu0
      %v1148 = vpop.f32.mrb[0].mxu0
      %v1149 = vadd.f32 0.0, %v1148
      %v1150 = vpop.f32.mrb[0].mxu0
      %1151 = vmatprep.mubr.bf16.mxu0 0
      %1152 = vmatmul.mubr.bf16.gmra.mrb[0].mxu0 %v1088
      %v1153 = vpop.f32.mrb[0].mxu0
      %v1154 = vadd.f32 0.0, %v1153
      %v1155 = vpop.f32.mrb[0].mxu0
      %v1156 = vpop.f32.mrb[0].mxu0
      %v1157 = vadd.f32 0.0, %v1156
      %v1158 = vpop.f32.mrb[0].mxu0
      %1159 = vmatprep.mubr.bf16.mxu0 0
      %1160 = vmatmul.mubr.bf16.gmra.mrb[0].mxu0 %v1091
      %v1161 = vpop.f32.mrb[0].mxu0
      %v1162 = vadd.f32 0.0, %v1161
      %v1163 = vpop.f32.mrb[0].mxu0
      %v1164 = vpop.f32.mrb[0].mxu0
      %v1165 = vadd.f32 0.0, %v1164
      %v1166 = vpop.f32.mrb[0].mxu0
      %1167 = vmatprep.mubr.bf16.mxu0 0
      %1168 = vmatmul.mubr.bf16.gmra.mrb[0].mxu0 %v1094
      %v1169 = vpop.f32.mrb[0].mxu0
      %v1170 = vadd.f32 0.0, %v1169
      %v1171 = vpop.f32.mrb[0].mxu0
      %v1172 = vpop.f32.mrb[0].mxu0
      %v1173 = vadd.f32 0.0, %v1172
      %v1174 = vpop.f32.mrb[0].mxu0
      %1175 = vmatprep.mubr.bf16.mxu0 0
      %1176 = vmatmul.mubr.bf16.gmra.mrb[0].mxu0 %v1097
      %v1177 = vpop.f32.mrb[0].mxu0
      %v1178 = vadd.f32 0.0, %v1177
      %v1179 = vpop.f32.mrb[0].mxu0
      %v1180 = vpop.f32.mrb[0].mxu0
      %v1181 = vadd.f32 0.0, %v1180
      %v1182 = vpop.f32.mrb[0].mxu0
      %1183 = vmatprep.mubr.bf16.mxu0 0
      %1184 = vmatmul.mubr.bf16.gmra.mrb[0].mxu0 %v1100
      %v1185 = vpop.f32.mrb[0].mxu0
      %v1186 = vadd.f32 0.0, %v1185
      %v1187 = vpop.f32.mrb[0].mxu0
      %v1188 = vpop.f32.mrb[0].mxu0
      %v1189 = vadd.f32 0.0, %v1188
      %v1190 = vpop.f32.mrb[0].mxu0
      %1191 = vmatprep.mubr.bf16.mxu0 0
      %1192 = vmatmul.mubr.bf16.gmra.mrb[0].mxu0 %v1103
      %v1193 = vpop.f32.mrb[0].mxu0
      %v1194 = vadd.f32 0.0, %v1193
      %v1195 = vpop.f32.mrb[0].mxu0
      %v1196 = vpop.f32.mrb[0].mxu0
      %v1197 = vadd.f32 0.0, %v1196
      %v1198 = vpop.f32.mrb[0].mxu0
      %1199 = vmatprep.mubr.bf16.mxu0 0
      %1200 = vmatmul.mubr.bf16.gmra.mrb[0].mxu0 %v1106
      %v1201 = vpop.f32.mrb[0].mxu0
      %v1202 = vadd.f32 0.0, %v1201
      %v1203 = vpop.f32.mrb[0].mxu0
      %v1204 = vpop.f32.mrb[0].mxu0
      %v1205 = vadd.f32 0.0, %v1204
      %v1206 = vpop.f32.mrb[0].mxu0
      %1207 = vdwg.mxu0
      %v1208 = vadd.f32 %v1051, %v1146
      %v1209 = vadd.f32 %v1052, %v1149
      %v1210 = vadd.f32 %v1053, %v1154
      %v1211 = vadd.f32 %v1054, %v1157
      %v1212 = vadd.f32 %v1055, %v1162
      %v1213 = vadd.f32 %v1056, %v1165
      %v1214 = vadd.f32 %v1057, %v1170
      %v1215 = vadd.f32 %v1058, %v1173
      %v1216 = vadd.f32 %v1059, %v1178
      %v1217 = vadd.f32 %v1060, %v1181
      %v1218 = vadd.f32 %v1061, %v1186
      %v1219 = vadd.f32 %v1062, %v1189
      %v1220 = vadd.f32 %v1063, %v1194
      %v1221 = vadd.f32 %v1064, %v1197
      %v1222 = vadd.f32 %v1065, %v1202
      %v1223 = vadd.f32 %v1066, %v1205
      %v1224 = vpack.c.bf16 %v1209, %v1208
      %v1225 = vpack.c.bf16 %v1211, %v1210
      %v1226 = vpack.c.bf16 %v1213, %v1212
      %v1227 = vpack.c.bf16 %v1215, %v1214
      %v1228 = vpack.c.bf16 %v1217, %v1216
      %v1229 = vpack.c.bf16 %v1219, %v1218
      %v1230 = vpack.c.bf16 %v1221, %v1220
      %v1231 = vpack.c.bf16 %v1223, %v1222
      %v1240 = vunpack.c.l.b16 %v1224
      %v1241 = vunpack.c.h.b16 %v1224
      %v1242 = vunpack.c.l.b16 %v1225
      %v1243 = vunpack.c.h.b16 %v1225
      %v1244 = vunpack.c.l.b16 %v1226
      %v1245 = vunpack.c.h.b16 %v1226
      %v1246 = vunpack.c.l.b16 %v1227
      %v1247 = vunpack.c.h.b16 %v1227
      %v1248 = vunpack.c.l.b16 %v1228
      %v1249 = vunpack.c.h.b16 %v1228
      %v1250 = vunpack.c.l.b16 %v1229
      %v1251 = vunpack.c.h.b16 %v1229
      %v1252 = vunpack.c.l.b16 %v1230
      %v1253 = vunpack.c.h.b16 %v1230
      %v1254 = vunpack.c.l.b16 %v1231
      %v1255 = vunpack.c.h.b16 %v1231
      %v1256 = vpack.c.b16 %v1240, %v1240
      %v1257 = vpack.c.b16 %v1241, %v1241
      %v1258 = vpack.c.b16 %v1242, %v1242
      %v1259 = vpack.c.b16 %v1243, %v1243
      %v1260 = vpack.c.b16 %v1244, %v1244
      %v1261 = vpack.c.b16 %v1245, %v1245
      %v1262 = vpack.c.b16 %v1246, %v1246
      %v1263 = vpack.c.b16 %v1247, %v1247
      %v1264 = vpack.c.b16 %v1248, %v1248
      %v1265 = vpack.c.b16 %v1249, %v1249
      %v1266 = vpack.c.b16 %v1250, %v1250
      %v1267 = vpack.c.b16 %v1251, %v1251
      %v1268 = vpack.c.b16 %v1252, %v1252
      %v1269 = vpack.c.b16 %v1253, %v1253
      %v1270 = vpack.c.b16 %v1254, %v1254
      %v1271 = vpack.c.b16 %v1255, %v1255
      %vm1288 = vcmask 125952
      %1289 = vst.msk [vmem:[%s194] sm:$0xf] %vm1288, %v1256
      %1290 = vst.msk [vmem:[%s194 + $0x4] sm:$0xf] %vm1288, %v1257
      %1291 = vst.msk [vmem:[%s194 + $0x10] sm:$0xf] %vm1288, %v1258
      %1292 = vst.msk [vmem:[%s194 + $0x14] sm:$0xf] %vm1288, %v1259
      %1293 = vst.msk [vmem:[%s194 + $0x20] sm:$0xf] %vm1288, %v1260
      %1294 = vst.msk [vmem:[%s194 + $0x24] sm:$0xf] %vm1288, %v1261
      %1295 = vst.msk [vmem:[%s194 + $0x30] sm:$0xf] %vm1288, %v1262
      %1296 = vst.msk [vmem:[%s194 + $0x34] sm:$0xf] %vm1288, %v1263
      %1297 = vst.msk [vmem:[%s194 + $0x40] sm:$0xf] %vm1288, %v1264
      %1298 = vst.msk [vmem:[%s194 + $0x44] sm:$0xf] %vm1288, %v1265
      %1299 = vst.msk [vmem:[%s194 + $0x50] sm:$0xf] %vm1288, %v1266
      %1300 = vst.msk [vmem:[%s194 + $0x54] sm:$0xf] %vm1288, %v1267
      %1301 = vst.msk [vmem:[%s194 + $0x60] sm:$0xf] %vm1288, %v1268
      %1302 = vst.msk [vmem:[%s194 + $0x64] sm:$0xf] %vm1288, %v1269
      %1303 = vst.msk [vmem:[%s194 + $0x70] sm:$0xf] %vm1288, %v1270
      %1304 = vst.msk [vmem:[%s194 + $0x74] sm:$0xf] %vm1288, %v1271
      %1305 = vrot.lane.b32.xlu0 %v1256, 112
      %v1306 = vpop.permute.xlu0 %1305
      %1307 = vrot.lane.b32.xlu0 %v1257, 112
      %v1308 = vpop.permute.xlu0 %1307
      %1309 = vrot.lane.b32.xlu0 %v1258, 112
      %v1310 = vpop.permute.xlu0 %1309
      %1311 = vrot.lane.b32.xlu0 %v1259, 112
      %v1312 = vpop.permute.xlu0 %1311
      %1313 = vrot.lane.b32.xlu0 %v1260, 112
      %v1314 = vpop.permute.xlu0 %1313
      %1315 = vrot.lane.b32.xlu0 %v1261, 112
      %v1316 = vpop.permute.xlu0 %1315
      %1317 = vrot.lane.b32.xlu0 %v1262, 112
      %v1318 = vpop.permute.xlu0 %1317
      %1319 = vrot.lane.b32.xlu0 %v1263, 112
      %v1320 = vpop.permute.xlu0 %1319
      %1321 = vrot.lane.b32.xlu0 %v1264, 112
      %v1322 = vpop.permute.xlu0 %1321
      %1323 = vrot.lane.b32.xlu0 %v1265, 112
      %v1324 = vpop.permute.xlu0 %1323
      %1325 = vrot.lane.b32.xlu0 %v1266, 112
      %v1326 = vpop.permute.xlu0 %1325
      %1327 = vrot.lane.b32.xlu0 %v1267, 112
      %v1328 = vpop.permute.xlu0 %1327
      %1329 = vrot.lane.b32.xlu0 %v1268, 112
      %v1330 = vpop.permute.xlu0 %1329
      %1331 = vrot.lane.b32.xlu0 %v1269, 112
      %v1332 = vpop.permute.xlu0 %1331
      %1333 = vrot.lane.b32.xlu0 %v1270, 112
      %v1334 = vpop.permute.xlu0 %1333
      %1335 = vrot.lane.b32.xlu0 %v1271, 112
      %v1336 = vpop.permute.xlu0 %1335
      %s1353 = scalar_lea.vmem %s194, 8
      %1354 = vst.msk [vmem:[%s1353] sm:$0xf] %vm1288, %v1306
      %1355 = vst.msk [vmem:[%s1353 + $0x4] sm:$0xf] %vm1288, %v1308
      %1356 = vst.msk [vmem:[%s1353 + $0x10] sm:$0xf] %vm1288, %v1310
      %1357 = vst.msk [vmem:[%s1353 + $0x14] sm:$0xf] %vm1288, %v1312
      %1358 = vst.msk [vmem:[%s1353 + $0x20] sm:$0xf] %vm1288, %v1314
      %1359 = vst.msk [vmem:[%s1353 + $0x24] sm:$0xf] %vm1288, %v1316
      %1360 = vst.msk [vmem:[%s1353 + $0x30] sm:$0xf] %vm1288, %v1318
      %1361 = vst.msk [vmem:[%s1353 + $0x34] sm:$0xf] %vm1288, %v1320
      %1362 = vst.msk [vmem:[%s1353 + $0x40] sm:$0xf] %vm1288, %v1322
      %1363 = vst.msk [vmem:[%s1353 + $0x44] sm:$0xf] %vm1288, %v1324
      %1364 = vst.msk [vmem:[%s1353 + $0x50] sm:$0xf] %vm1288, %v1326
      %1365 = vst.msk [vmem:[%s1353 + $0x54] sm:$0xf] %vm1288, %v1328
      %1366 = vst.msk [vmem:[%s1353 + $0x60] sm:$0xf] %vm1288, %v1330
      %1367 = vst.msk [vmem:[%s1353 + $0x64] sm:$0xf] %vm1288, %v1332
      %1368 = vst.msk [vmem:[%s1353 + $0x70] sm:$0xf] %vm1288, %v1334
      %1369 = vst.msk [vmem:[%s1353 + $0x74] sm:$0xf] %vm1288, %v1336
      %s1370 = smul.u32 8, %s19
      %p1371 = scmp.lt.s32.totalorder %s18, 1
      %s1372 = scalar_select %p1371, %s18, 1
      %p1373 = scmp.lt.s32.totalorder %s1370, 15
      %s1374 = scalar_select %p1373, %s1370, 15
      %s1375 = smul.addr %s1374, 4
      %s1376 = smul.addr %s1372, 64
      %s1377 = sadd.s32 %s1375, %s1376
      %s1378 = smul.addr %s1377, 4
      %s1379 = scalar_lea.vmem %s3, %s1378
      // Predicated region
      $region33: #{upsample_forward.1} parent=31 // pred_check
        %p1380 = pneg %p114
      $region34: #{upsample_forward.1} parent=31 // pred_check_branch
        %1382 = sbr.rel (%p1380) target = $region36
      $region35: #{upsample_forward.1} parent=31 // pred_region
        %s1383 = smul.u32 8, %s19
      $region36: #{upsample_forward.1} parent=31 // pred_fallthru
        _
    $region32: #{upsample_forward.1} parent=5 // pred_fallthru
      _
    %p1384 = scmp.le.s32.totalorder 2, %s9
    // Predicated region
    $region37: #{upsample_forward.1} parent=5 // pred_check
      %p1385 = pneg %p1384
    $region38: #{upsample_forward.1} parent=5 // pred_check_branch
      %1387 = sbr.rel (%p1385) target = $region40
    $region39: #{upsample_forward.1} parent=5 // pred_region
      %s1388 = ssub.s32 %s9, 2
      // Predicated region
      $region41: #{upsample_forward.1} parent=39 // pred_check
        %p1389 = pneg %p120
      $region42: #{upsample_forward.1} parent=39 // pred_check_branch
        %1391 = sbr.rel (%p1389) target = $region44
      $region43: #{upsample_forward.1} parent=39 // pred_region
        %s1392 = smul.u32 8, %s21
        %p1393 = scmp.lt.s32.totalorder %s20, 1
        %s1394 = scalar_select %p1393, %s20, 1
        %p1395 = scmp.lt.s32.totalorder %s1392, 15
        %s1396 = scalar_select %p1395, %s1392, 15
        %s1397 = smul.addr %s1396, 4
        %s1398 = smul.addr %s1394, 64
        %s1399 = sadd.s32 %s1397, %s1398
        %s1400 = smul.addr %s1399, 4
        %s1401 = scalar_lea.vmem %s3, %s1400
      $region44: #{upsample_forward.1} parent=39 // pred_fallthru
        _
    $region40: #{upsample_forward.1} parent=5 // pred_fallthru
      _
  $region6: #{upsample_forward.1} parent=0 // loop_footer
    %s13 = sadd.s32 1, %s9
  $region7: #{upsample_forward.1} parent=0 // loop_footer_branch
    %8 = sbr.rel target = $region3
  $region8: #{upsample_forward.1} parent=0 // loop_exit
    _

// kernel: tile.9
$region0: #{tile.9}
  %s0 = inlined_call_operand.vmem [shape: f32[4,8], index: 0, kind: input, shape index: {}]
  %s1 = inlined_call_operand.vmem [shape: f32[1,32], index: 1, kind: output, shape index: {}]
  $region1: #{tile.9} parent=0
    #allocation0 [shape = 'u8[4096]{0}', space=vmem, size = 0x1000, scoped, tag = 'scoped mem for output reshape']
    #allocation1 [shape = 'u8[4096]{0}', space=vmem, size = 0x1000, scoped, tag = 'scoped mem for input reshape']
    %s3 = sshllo.u32 0, 4
    %v4 = vld [vmem:[%s0] sm:%s3]
    %5 = vst [vmem:[#allocation1] sm:%s3] %v4
    %v6 = vld [vmem:[#allocation1] sm:$0x1]
    %vm7 = vcmask 64512
    %8 = vst.msk [vmem:[#allocation0] sm:$0x1] %vm7, %v6
    %s9 = scalar_lea.vmem [#allocation1], 3
    %v10 = vld [vmem:[%s9] sm:$0x1]
    %11 = vrot.lane.b32.xlu0 %v10, 24
    %v12 = vpop.permute.xlu0 %11
    %vm13 = vcmask 261312
    %14 = vst.msk [vmem:[#allocation0] sm:$0x1] %vm13, %v12
    %s15 = scalar_lea.vmem [#allocation1], 2
    %v16 = vld [vmem:[%s15] sm:$0x1]
    %17 = vrot.lane.b32.xlu0 %v16, 16
    %v18 = vpop.permute.xlu0 %17
    %vm19 = vcmask 195712
    %20 = vst.msk [vmem:[#allocation0] sm:$0x1] %vm19, %v18
    %s21 = scalar_lea.vmem [#allocation1], 1
    %v22 = vld [vmem:[%s21] sm:$0x1]
    %23 = vrot.lane.b32.xlu0 %v22, 8
    %v24 = vpop.permute.xlu0 %23
    %vm25 = vcmask 130112
    %26 = vst.msk [vmem:[#allocation0] sm:$0x1] %vm25, %v24
    %s28 = sshllo.u32 0, 1
    %v30 = vld [vmem:[#allocation0] sm:%s28]
    %s31 = sshllo.u32 0, 1
    %32 = vst [vmem:[%s1] sm:%s31] %v30

// kernel: tile.8
$region0: #{tile.8}
  #allocation0 [shape = 's32[1]{0}', space=sflag, size = 0x4, scoped, tag = 'scoped memory for tile.8']
  %s0 = inlined_call_operand.vmem [shape: f32[8], index: 0, kind: input, shape index: {}]
  %s1 = inlined_call_operand.vmem [shape: f32[4,8], index: 1, kind: output, shape index: {}]
  // Predicated region
  $region2: #{tile.8} parent=0 // pred_check
    _
  $region3: #{tile.8} parent=0 // pred_check_branch
    %3 = sbr.rel (0) target = $region5
  $region4: #{tile.8} parent=0 // pred_region
    _
  $region5: #{tile.8} parent=0 // pred_fallthru
    _
  %v4 = vld [vmem:[%s0] ss:$0 sm:$0xff]
  %5 = vst [vmem:[%s1] sm:$0xf] %v4

// kernel: upsample_forward.1
$region0: #{upsample_forward.1}
  #allocation0 [shape = 'u32[]', space=smem, size = 0x4, offset = 0x4, fixed_abs, tag = 'smem constant byte address 0x4 - core index']
  #allocation1 [shape = 'u32[144,128]{1,0:T(1,128)}', space=vmem, size = 0x12000, scoped, tag = 'internal scratch']
  #allocation2 [shape = 'bf16[10,16,12]{2,1,0:T(16,128)(2,1)}', space=vmem, size = 0xa000, scoped, tag = 'scratch operand']
  %s0 = inlined_call_operand.vmem [shape: bf16[2,18,18,4], index: 0, kind: input, shape index: {}]
  %s1 = inlined_call_operand.vmem [shape: bf16[3,12,32], index: 1, kind: input, shape index: {}]
  %s2 = inlined_call_operand.vmem [shape: f32[1,32], index: 2, kind: input, shape index: {}]
  %s3 = inlined_call_operand.vmem [shape: bf16[2,16,2,16,16], index: 3, kind: output, shape index: {}]
  %s4 = sld [smem:[#allocation0]]
  $region45: #{upsample_forward.1} parent=0
    _
  %s6 = ssub.s32 1, %s4
  %s7 = scalar_select 0, %s6, %s4
  loop: start=0, step=1, limit=6
  $region2: #{upsample_forward.1} parent=0 // loop_pre_header
    _
  $region3: #{upsample_forward.1} parent=0 // loop_header
    %s9 = sphi 0, %s13
    %p10 = scmp.ge.s32.totalorder %s9, 6
    %s16 = sphi 0, %s28
    %s17 = sphi 0, %s24
    %s18 = sphi 0, %s16
    %s19 = sphi 0, %s17
    %s20 = sphi 0, %s18
    %s21 = sphi 0, %s19
    %s31 = sphi 0, %s33
    %s34 = sphi 0, %s31
    %s35 = sphi 0, %s34
    %s51 = sphi 0, %s35
    %s55 = sphi 0, %s55
    %s57 = sphi 0, %s55
    %s58 = sphi 0, %s57
    %s72 = sphi 0, %s58
    %s76 = sphi 0, %s76
    %s78 = sphi 0, %s76
    %s79 = sphi 0, %s78
    %s93 = sphi 0, %s79
    %s101 = sphi 0, %s103
    %s104 = sphi 0, %s101
    %s105 = sphi 0, %s104
    %s121 = sphi 0, %s105
  $region4: #{upsample_forward.1} parent=0 // loop_header_branch
    %12 = sbr.rel (%p10) target = $region8
  $region5: #{upsample_forward.1} parent=0 // loop_body
    %s14 = ssub.s32 %s9, 1
    %s15 = ssub.s32 %s9, 2
    %s22 = sadd.s32 1, %s17
    %p23 = scmp.ge.s32.totalorder %s22, 2
    %s24 = scalar_select %p23, 0, %s22
    %s25 = sadd.s32 1, %s16
    %s26 = scalar_select %p23, %s25, %s16
    %p27 = scmp.ge.s32.totalorder %s26, 2
    %s28 = scalar_select %p27, 0, %s26
    %s29 = ssub.s32 %s16, %s28
    %p30 = scmp.eq.s32.totalorder %s29, 0
    %s32 = sadd.s32 %s31, 1
    %s33 = scalar_select %p30, %s31, %s32
    %p36 = pneg %p30
    %p37 = scmp.eq.s32.totalorder %s9, 3
    %p38 = por %p36, %p37
    %p39 = scmp.ne.s32.totalorder %s31, %s34
    %p40 = scmp.eq.s32.totalorder %s9, 0
    %p41 = por %p39, %p40
    %p42 = scmp.ne.s32.totalorder %s31, %s34
    %p43 = scmp.eq.s32.totalorder %s14, 3
    %p44 = por %p42, %p43
    %p45 = scmp.ne.s32.totalorder %s34, %s35
    %p46 = scmp.eq.s32.totalorder %s14, 0
    %p47 = por %p45, %p46
    %p48 = scmp.ne.s32.totalorder %s34, %s35
    %p49 = scmp.eq.s32.totalorder %s15, 3
    %p50 = por %p48, %p49
    %p52 = scmp.ne.s32.totalorder %s35, %s51
    %p53 = scmp.eq.s32.totalorder %s15, 0
    %p54 = por %p52, %p53
    %s56 = sadd.s32 %s55, 1
    %p59 = scmp.eq.s32.totalorder %s9, 3
    %p60 = scmp.ne.s32.totalorder %s55, %s57
    %p61 = scmp.eq.s32.totalorder %s9, 0
    %p62 = por %p60, %p61
    %p63 = scmp.ne.s32.totalorder %s55, %s57
    %p64 = scmp.eq.s32.totalorder %s14, 3
    %p65 = por %p63, %p64
    %p66 = scmp.ne.s32.totalorder %s57, %s58
    %p67 = scmp.eq.s32.totalorder %s14, 0
    %p68 = por %p66, %p67
    %p69 = scmp.ne.s32.totalorder %s57, %s58
    %p70 = scmp.eq.s32.totalorder %s15, 3
    %p71 = por %p69, %p70
    %p73 = scmp.ne.s32.totalorder %s58, %s72
    %p74 = scmp.eq.s32.totalorder %s15, 0
    %p75 = por %p73, %p74
    %s77 = sadd.s32 %s76, 1
    %p80 = scmp.eq.s32.totalorder %s9, 3
    %p81 = scmp.ne.s32.totalorder %s76, %s78
    %p82 = scmp.eq.s32.totalorder %s9, 0
    %p83 = por %p81, %p82
    %p84 = scmp.ne.s32.totalorder %s76, %s78
    %p85 = scmp.eq.s32.totalorder %s14, 3
    %p86 = por %p84, %p85
    %p87 = scmp.ne.s32.totalorder %s78, %s79
    %p88 = scmp.eq.s32.totalorder %s14, 0
    %p89 = por %p87, %p88
    %p90 = scmp.ne.s32.totalorder %s78, %s79
    %p91 = scmp.eq.s32.totalorder %s15, 3
    %p92 = por %p90, %p91
    %p94 = scmp.ne.s32.totalorder %s79, %s93
    %p95 = scmp.eq.s32.totalorder %s15, 0
    %p96 = por %p94, %p95
    %s97 = ssub.s32 %s16, %s28
    %s98 = ssub.s32 %s17, %s24
    %s99 = sor.u32 %s97, %s98
    %p100 = scmp.eq.s32.totalorder %s99, 0
    %s102 = sadd.s32 %s101, 1
    %s103 = scalar_select %p100, %s101, %s102
    %p106 = pneg %p100
    %p107 = scmp.eq.s32.totalorder %s9, 3
    %p108 = por %p106, %p107
    %p109 = scmp.ne.s32.totalorder %s101, %s104
    %p110 = scmp.eq.s32.totalorder %s9, 0
    %p111 = por %p109, %p110
    %p112 = scmp.ne.s32.totalorder %s101, %s104
    %p113 = scmp.eq.s32.totalorder %s14, 3
    %p114 = por %p112, %p113
    %p115 = scmp.ne.s32.totalorder %s104, %s105
    %p116 = scmp.eq.s32.totalorder %s14, 0
    %p117 = por %p115, %p116
    %p118 = scmp.ne.s32.totalorder %s104, %s105
    %p119 = scmp.eq.s32.totalorder %s15, 3
    %p120 = por %p118, %p119
    %p122 = scmp.ne.s32.totalorder %s105, %s121
    %p123 = scmp.eq.s32.totalorder %s15, 0
    %p124 = por %p122, %p123
    %p125 = scmp.le.s32.totalorder 1, %s9
    %p126 = scmp.lt.s32.totalorder %s9, 5
    %p127 = pnand %p125, %p126
    %p128 = pneg %p127
    // Predicated region
    $region9: #{upsample_forward.1} parent=5 // pred_check
      _
    $region10: #{upsample_forward.1} parent=5 // pred_check_branch
      %130 = sbr.rel (%p127) target = $region12
    $region11: #{upsample_forward.1} parent=5 // pred_region
      %s131 = ssub.s32 %s9, 1
      // Predicated region
      $region13: #{upsample_forward.1} parent=11 // pred_check
        %p132 = pneg %p68
      $region14: #{upsample_forward.1} parent=11 // pred_check_branch
        %134 = sbr.rel (%p132) target = $region16
      $region15: #{upsample_forward.1} parent=11 // pred_region
        _
      $region16: #{upsample_forward.1} parent=11 // pred_fallthru
        _
      // Predicated region
      $region17: #{upsample_forward.1} parent=11 // pred_check
        %p135 = pneg %p89
      $region18: #{upsample_forward.1} parent=11 // pred_check_branch
        %137 = sbr.rel (%p135) target = $region20
      $region19: #{upsample_forward.1} parent=11 // pred_region
        _
      $region20: #{upsample_forward.1} parent=11 // pred_fallthru
        _
    $region12: #{upsample_forward.1} parent=5 // pred_fallthru
      _
    %p138 = scmp.lt.s32.totalorder %s9, 4
    // Predicated region
    $region21: #{upsample_forward.1} parent=5 // pred_check
      %p139 = pneg %p138
    $region22: #{upsample_forward.1} parent=5 // pred_check_branch
      %141 = sbr.rel (%p139) target = $region24
    $region23: #{upsample_forward.1} parent=5 // pred_region
      // Predicated region
      $region25: #{upsample_forward.1} parent=23 // pred_check
        %p142 = pneg %p41
      $region26: #{upsample_forward.1} parent=23 // pred_check_branch
        %144 = sbr.rel (%p142) target = $region28
      $region27: #{upsample_forward.1} parent=23 // pred_region
        %p145 = scmp.lt.s32.totalorder %s16, 1
        %s146 = scalar_select %p145, %s16, 1
        %s147 = smul.addr %s146, 54
        %s148 = smul.addr %s147, 4
        %s149 = scalar_lea.vmem %s0, %s148
      $region28: #{upsample_forward.1} parent=23 // pred_fallthru
        _
    $region24: #{upsample_forward.1} parent=5 // pred_fallthru
      _
    %p150 = scmp.le.s32.totalorder 1, %s9
    %p151 = scmp.lt.s32.totalorder %s9, 5
    %p152 = pnand %p150, %p151
    %p153 = pneg %p152
    // Predicated region
    $region29: #{upsample_forward.1} parent=5 // pred_check
      _
    $region30: #{upsample_forward.1} parent=5 // pred_check_branch
      %155 = sbr.rel (%p152) target = $region32
    $region31: #{upsample_forward.1} parent=5 // pred_region
      %s156 = ssub.s32 %s9, 1
      %p157 = scmp.lt.s32.totalorder %s18, 1
      %s158 = scalar_select %p157, %s18, 1
      %s159 = smul.addr %s158, 54
      %s160 = smul.addr %s159, 4
      %s161 = scalar_lea.vmem %s0, %s160
      %p162 = pneg %p47
      %p163 = pneg %p44
      %p164 = pneg %p68
      %p165 = pneg %p65
      %p166 = pneg %p89
      %p167 = pneg %p86
      %p168 = pneg %p117
      %p169 = pneg %p114
      %s170 = smul.u32 8, %s19
      %p171 = scmp.lt.s32.totalorder %s18, 1
      %s172 = scalar_select %p171, %s18, 1
      %p173 = scmp.lt.s32.totalorder %s170, 15
      %s174 = scalar_select %p173, %s170, 15
      %s175 = smul.addr %s174, 4
      %s176 = smul.addr %s172, 64
      %s177 = sadd.s32 %s175, %s176
      %s178 = smul.addr %s177, 4
      %s179 = scalar_lea.vmem %s3, %s178
      %p180 = scmp.lt.s32.totalorder %s18, 1
      %s181 = scalar_select %p180, %s18, 1
      %s182 = smul.addr %s181, 54
      %s183 = smul.addr %s182, 4
      %s184 = scalar_lea.vmem %s0, %s183
      %s185 = smul.u32 8, %s19
      %p186 = scmp.lt.s32.totalorder %s18, 1
      %s187 = scalar_select %p186, %s18, 1
      %p188 = scmp.lt.s32.totalorder %s185, 15
      %s189 = scalar_select %p188, %s185, 15
      %s190 = smul.addr %s189, 4
      %s191 = smul.addr %s187, 64
      %s192 = sadd.s32 %s190, %s191
      %s193 = smul.addr %s192, 4
      %s194 = scalar_lea.vmem %s3, %s193
      %s195 = smul.u32 8, %s19
      %s197 = smul.u32 %s19, 8
      %s198 = smul.u32 %s197, 3
      %s199 = smul.addr %s198, 4
      %s200 = scalar_lea.vmem %s184, %s199
      %v201 = vld [vmem:[%s200] sm:$0xf]
      %v202 = vld [vmem:[%s200 + $0x4] sm:$0xf]
      %v203 = vld [vmem:[%s200 + $0xc] sm:$0xf]
      %v204 = vld [vmem:[%s200 + $0x10] sm:$0xf]
      %v205 = vld [vmem:[%s200 + $0x18] sm:$0xf]
      %v206 = vld [vmem:[%s200 + $0x1c] sm:$0xf]
      %v207 = vld [vmem:[%s200 + $0x24] sm:$0xf]
      %v208 = vld [vmem:[%s200 + $0x28] sm:$0xf]
      %v209 = vld [vmem:[%s200 + $0x30] sm:$0xf]
      %v210 = vld [vmem:[%s200 + $0x34] sm:$0xf]
      %v211 = vld [vmem:[%s200 + $0x3c] sm:$0xf]
      %v212 = vld [vmem:[%s200 + $0x40] sm:$0xf]
      %v213 = vld [vmem:[%s200 + $0x48] sm:$0xf]
      %v214 = vld [vmem:[%s200 + $0x4c] sm:$0xf]
      %v215 = vld [vmem:[%s200 + $0x54] sm:$0xf]
      %v216 = vld [vmem:[%s200 + $0x58] sm:$0xf]
      %v217 = vld [vmem:[%s200 + $0x60] sm:$0xf]
      %v218 = vld [vmem:[%s200 + $0x64] sm:$0xf]
      %v219 = vld [vmem:[%s200 + $0x6c] sm:$0xf]
      %v220 = vld [vmem:[%s200 + $0x70] sm:$0xf]
      %v241 = vunpack.c.l.b16 %v201
      %v242 = vunpack.c.l.b16 %v202
      %v243 = vunpack.c.l.b16 %v203
      %v244 = vunpack.c.l.b16 %v204
      %v245 = vunpack.c.l.b16 %v205
      %v246 = vunpack.c.l.b16 %v206
      %v247 = vunpack.c.l.b16 %v207
      %v248 = vunpack.c.l.b16 %v208
      %v249 = vunpack.c.l.b16 %v209
      %v250 = vunpack.c.l.b16 %v210
      %v251 = vunpack.c.l.b16 %v211
      %v252 = vunpack.c.l.b16 %v212
      %v253 = vunpack.c.l.b16 %v213
      %v254 = vunpack.c.l.b16 %v214
      %v255 = vunpack.c.l.b16 %v215
      %v256 = vunpack.c.l.b16 %v216
      %v257 = vunpack.c.l.b16 %v217
      %v258 = vunpack.c.l.b16 %v218
      %v259 = vunpack.c.l.b16 %v219
      %v260 = vunpack.c.l.b16 %v220
      %v261 = vpack.c.b16 %v242, %v241
      %v262 = vpack.c.b16 %v244, %v243
      %v263 = vpack.c.b16 %v246, %v245
      %v264 = vpack.c.b16 %v248, %v247
      %v265 = vpack.c.b16 %v250, %v249
      %v266 = vpack.c.b16 %v252, %v251
      %v267 = vpack.c.b16 %v254, %v253
      %v268 = vpack.c.b16 %v256, %v255
      %v269 = vpack.c.b16 %v258, %v257
      %v270 = vpack.c.b16 %v260, %v259
      %vm281 = vcmask 31744
      %282 = vst.msk [vmem:[#allocation2] sm:$0xff] %vm281, %v261
      %283 = vst.msk [vmem:[#allocation2 + $0x8] sm:$0xff] %vm281, %v262
      %284 = vst.msk [vmem:[#allocation2 + $0x10] sm:$0xff] %vm281, %v263
      %285 = vst.msk [vmem:[#allocation2 + $0x18] sm:$0xff] %vm281, %v264
      %286 = vst.msk [vmem:[#allocation2 + $0x20] sm:$0xff] %vm281, %v265
      %287 = vst.msk [vmem:[#allocation2 + $0x28] sm:$0xff] %vm281, %v266
      %288 = vst.msk [vmem:[#allocation2 + $0x30] sm:$0xff] %vm281, %v267
      %289 = vst.msk [vmem:[#allocation2 + $0x38] sm:$0xff] %vm281, %v268
      %290 = vst.msk [vmem:[#allocation2 + $0x40] sm:$0xff] %vm281, %v269
      %291 = vst.msk [vmem:[#allocation2 + $0x48] sm:$0xff] %vm281, %v270
      %v292 = vld [vmem:[%s200] sm:$0xf]
      %v293 = vld [vmem:[%s200 + $0x4] sm:$0xf]
      %v294 = vld [vmem:[%s200 + $0x8] sm:$0x1]
      %v295 = vld [vmem:[%s200 + $0xc] sm:$0xf]
      %v296 = vld [vmem:[%s200 + $0x10] sm:$0xf]
      %v297 = vld [vmem:[%s200 + $0x14] sm:$0x1]
      %v298 = vld [vmem:[%s200 + $0x18] sm:$0xf]
      %v299 = vld [vmem:[%s200 + $0x1c] sm:$0xf]
      %v300 = vld [vmem:[%s200 + $0x20] sm:$0x1]
      %v301 = vld [vmem:[%s200 + $0x24] sm:$0xf]
      %v302 = vld [vmem:[%s200 + $0x28] sm:$0xf]
      %v303 = vld [vmem:[%s200 + $0x2c] sm:$0x1]
      %v304 = vld [vmem:[%s200 + $0x30] sm:$0xf]
      %v305 = vld [vmem:[%s200 + $0x34] sm:$0xf]
      %v306 = vld [vmem:[%s200 + $0x38] sm:$0x1]
      %v307 = vld [vmem:[%s200 + $0x3c] sm:$0xf]
      %v308 = vld [vmem:[%s200 + $0x40] sm:$0xf]
      %v309 = vld [vmem:[%s200 + $0x44] sm:$0x1]
      %v310 = vld [vmem:[%s200 + $0x48] sm:$0xf]
      %v311 = vld [vmem:[%s200 + $0x4c] sm:$0xf]
      %v312 = vld [vmem:[%s200 + $0x50] sm:$0x1]
      %v313 = vld [vmem:[%s200 + $0x54] sm:$0xf]
      %v314 = vld [vmem:[%s200 + $0x58] sm:$0xf]
      %v315 = vld [vmem:[%s200 + $0x5c] sm:$0x1]
      %v316 = vld [vmem:[%s200 + $0x60] sm:$0xf]
      %v317 = vld [vmem:[%s200 + $0x64] sm:$0xf]
      %v318 = vld [vmem:[%s200 + $0x68] sm:$0x1]
      %v319 = vld [vmem:[%s200 + $0x6c] sm:$0xf]
      %v320 = vld [vmem:[%s200 + $0x70] sm:$0xf]
      %v321 = vld [vmem:[%s200 + $0x74] sm:$0x1]
      %v352 = vunpack.c.l.b16 %v292
      %v353 = vunpack.c.l.b16 %v293
      %v354 = vunpack.c.l.b16 %v294
      %v355 = vunpack.c.l.b16 %v295
      %v356 = vunpack.c.l.b16 %v296
      %v357 = vunpack.c.l.b16 %v297
      %v358 = vunpack.c.l.b16 %v298
      %v359 = vunpack.c.l.b16 %v299
      %v360 = vunpack.c.l.b16 %v300
      %v361 = vunpack.c.l.b16 %v301
      %v362 = vunpack.c.l.b16 %v302
      %v363 = vunpack.c.l.b16 %v303
      %v364 = vunpack.c.l.b16 %v304
      %v365 = vunpack.c.l.b16 %v305
      %v366 = vunpack.c.l.b16 %v306
      %v367 = vunpack.c.l.b16 %v307
      %v368 = vunpack.c.l.b16 %v308
      %v369 = vunpack.c.l.b16 %v309
      %v370 = vunpack.c.l.b16 %v310
      %v371 = vunpack.c.l.b16 %v311
      %v372 = vunpack.c.l.b16 %v312
      %v373 = vunpack.c.l.b16 %v313
      %v374 = vunpack.c.l.b16 %v314
      %v375 = vunpack.c.l.b16 %v315
      %v376 = vunpack.c.l.b16 %v316
      %v377 = vunpack.c.l.b16 %v317
      %v378 = vunpack.c.l.b16 %v318
      %v379 = vunpack.c.l.b16 %v319
      %v380 = vunpack.c.l.b16 %v320
      %v381 = vunpack.c.l.b16 %v321
      %v382 = vpack.c.b16 %v353, %v352
      %v383 = vpack.c.b16 %v354, %v354
      %v384 = vpack.c.b16 %v356, %v355
      %v385 = vpack.c.b16 %v357, %v357
      %v386 = vpack.c.b16 %v359, %v358
      %v387 = vpack.c.b16 %v360, %v360
      %v388 = vpack.c.b16 %v362, %v361
      %v389 = vpack.c.b16 %v363, %v363
      %v390 = vpack.c.b16 %v365, %v364
      %v391 = vpack.c.b16 %v366, %v366
      %v392 = vpack.c.b16 %v368, %v367
      %v393 = vpack.c.b16 %v369, %v369
      %v394 = vpack.c.b16 %v371, %v370
      %v395 = vpack.c.b16 %v372, %v372
      %v396 = vpack.c.b16 %v374, %v373
      %v397 = vpack.c.b16 %v375, %v375
      %v398 = vpack.c.b16 %v377, %v376
      %v399 = vpack.c.b16 %v378, %v378
      %v400 = vpack.c.b16 %v380, %v379
      %v401 = vpack.c.b16 %v381, %v381
      %vm402 = vsmask.f32 7424
      %v404 = vshrl.u32 %v382, 16
      %v406 = vshll.u32 %v382, 16
      %v408 = vrot.slane %v406, 1
      %v409 = vor.u32 %v404, %v408
      %v411 = vshll.u32 %v383, 16
      %v413 = vrot.slane %v411, 1
      %v414 = vsel %vm402, %v409, %v413
      %v416 = vshrl.u32 %v384, 16
      %v418 = vshll.u32 %v384, 16
      %v420 = vrot.slane %v418, 1
      %v421 = vor.u32 %v416, %v420
      %v423 = vshll.u32 %v385, 16
      %v425 = vrot.slane %v423, 1
      %v426 = vsel %vm402, %v421, %v425
      %v428 = vshrl.u32 %v386, 16
      %v430 = vshll.u32 %v386, 16
      %v432 = vrot.slane %v430, 1
      %v433 = vor.u32 %v428, %v432
      %v435 = vshll.u32 %v387, 16
      %v437 = vrot.slane %v435, 1
      %v438 = vsel %vm402, %v433, %v437
      %v440 = vshrl.u32 %v388, 16
      %v442 = vshll.u32 %v388, 16
      %v444 = vrot.slane %v442, 1
      %v445 = vor.u32 %v440, %v444
      %v447 = vshll.u32 %v389, 16
      %v449 = vrot.slane %v447, 1
      %v450 = vsel %vm402, %v445, %v449
      %v452 = vshrl.u32 %v390, 16
      %v454 = vshll.u32 %v390, 16
      %v456 = vrot.slane %v454, 1
      %v457 = vor.u32 %v452, %v456
      %v459 = vshll.u32 %v391, 16
      %v461 = vrot.slane %v459, 1
      %v462 = vsel %vm402, %v457, %v461
      %v464 = vshrl.u32 %v392, 16
      %v466 = vshll.u32 %v392, 16
      %v468 = vrot.slane %v466, 1
      %v469 = vor.u32 %v464, %v468
      %v471 = vshll.u32 %v393, 16
      %v473 = vrot.slane %v471, 1
      %v474 = vsel %vm402, %v469, %v473
      %v476 = vshrl.u32 %v394, 16
      %v478 = vshll.u32 %v394, 16
      %v480 = vrot.slane %v478, 1
      %v481 = vor.u32 %v476, %v480
      %v483 = vshll.u32 %v395, 16
      %v485 = vrot.slane %v483, 1
      %v486 = vsel %vm402, %v481, %v485
      %v488 = vshrl.u32 %v396, 16
      %v490 = vshll.u32 %v396, 16
      %v492 = vrot.slane %v490, 1
      %v493 = vor.u32 %v488, %v492
      %v495 = vshll.u32 %v397, 16
      %v497 = vrot.slane %v495, 1
      %v498 = vsel %vm402, %v493, %v497
      %v500 = vshrl.u32 %v398, 16
      %v502 = vshll.u32 %v398, 16
      %v504 = vrot.slane %v502, 1
      %v505 = vor.u32 %v500, %v504
      %v507 = vshll.u32 %v399, 16
      %v509 = vrot.slane %v507, 1
      %v510 = vsel %vm402, %v505, %v509
      %v512 = vshrl.u32 %v400, 16
      %v514 = vshll.u32 %v400, 16
      %v516 = vrot.slane %v514, 1
      %v517 = vor.u32 %v512, %v516
      %v519 = vshll.u32 %v401, 16
      %v521 = vrot.slane %v519, 1
      %v522 = vsel %vm402, %v517, %v521
      %523 = vrot.lane.b32.xlu0 %v414, 4
      %v524 = vpop.permute.xlu0 %523
      %525 = vrot.lane.b32.xlu0 %v426, 4
      %v526 = vpop.permute.xlu0 %525
      %527 = vrot.lane.b32.xlu0 %v438, 4
      %v528 = vpop.permute.xlu0 %527
      %529 = vrot.lane.b32.xlu0 %v450, 4
      %v530 = vpop.permute.xlu0 %529
      %531 = vrot.lane.b32.xlu0 %v462, 4
      %v532 = vpop.permute.xlu0 %531
      %533 = vrot.lane.b32.xlu0 %v474, 4
      %v534 = vpop.permute.xlu0 %533
      %535 = vrot.lane.b32.xlu0 %v486, 4
      %v536 = vpop.permute.xlu0 %535
      %537 = vrot.lane.b32.xlu0 %v498, 4
      %v538 = vpop.permute.xlu0 %537
      %539 = vrot.lane.b32.xlu0 %v510, 4
      %v540 = vpop.permute.xlu0 %539
      %541 = vrot.lane.b32.xlu0 %v522, 4
      %v542 = vpop.permute.xlu0 %541
      %vm553 = vcmask 64544
      %554 = vst.msk [vmem:[#allocation2] sm:$0xff] %vm553, %v524
      %555 = vst.msk [vmem:[#allocation2 + $0x8] sm:$0xff] %vm553, %v526
      %556 = vst.msk [vmem:[#allocation2 + $0x10] sm:$0xff] %vm553, %v528
      %557 = vst.msk [vmem:[#allocation2 + $0x18] sm:$0xff] %vm553, %v530
      %558 = vst.msk [vmem:[#allocation2 + $0x20] sm:$0xff] %vm553, %v532
      %559 = vst.msk [vmem:[#allocation2 + $0x28] sm:$0xff] %vm553, %v534
      %560 = vst.msk [vmem:[#allocation2 + $0x30] sm:$0xff] %vm553, %v536
      %561 = vst.msk [vmem:[#allocation2 + $0x38] sm:$0xff] %vm553, %v538
      %562 = vst.msk [vmem:[#allocation2 + $0x40] sm:$0xff] %vm553, %v540
      %563 = vst.msk [vmem:[#allocation2 + $0x48] sm:$0xff] %vm553, %v542
      %v564 = vld [vmem:[%s200] sm:$0xe]
      %v565 = vld [vmem:[%s200 + $0x4] sm:$0xf]
      %v566 = vld [vmem:[%s200 + $0x8] sm:$0x1]
      %v567 = vld [vmem:[%s200 + $0xc] sm:$0xe]
      %v568 = vld [vmem:[%s200 + $0x10] sm:$0xf]
      %v569 = vld [vmem:[%s200 + $0x14] sm:$0x1]
      %v570 = vld [vmem:[%s200 + $0x18] sm:$0xe]
      %v571 = vld [vmem:[%s200 + $0x1c] sm:$0xf]
      %v572 = vld [vmem:[%s200 + $0x20] sm:$0x1]
      %v573 = vld [vmem:[%s200 + $0x24] sm:$0xe]
      %v574 = vld [vmem:[%s200 + $0x28] sm:$0xf]
      %v575 = vld [vmem:[%s200 + $0x2c] sm:$0x1]
      %v576 = vld [vmem:[%s200 + $0x30] sm:$0xe]
      %v577 = vld [vmem:[%s200 + $0x34] sm:$0xf]
      %v578 = vld [vmem:[%s200 + $0x38] sm:$0x1]
      %v579 = vld [vmem:[%s200 + $0x3c] sm:$0xe]
      %v580 = vld [vmem:[%s200 + $0x40] sm:$0xf]
      %v581 = vld [vmem:[%s200 + $0x44] sm:$0x1]
      %v582 = vld [vmem:[%s200 + $0x48] sm:$0xe]
      %v583 = vld [vmem:[%s200 + $0x4c] sm:$0xf]
      %v584 = vld [vmem:[%s200 + $0x50] sm:$0x1]
      %v585 = vld [vmem:[%s200 + $0x54] sm:$0xe]
      %v586 = vld [vmem:[%s200 + $0x58] sm:$0xf]
      %v587 = vld [vmem:[%s200 + $0x5c] sm:$0x1]
      %v588 = vld [vmem:[%s200 + $0x60] sm:$0xe]
      %v589 = vld [vmem:[%s200 + $0x64] sm:$0xf]
      %v590 = vld [vmem:[%s200 + $0x68] sm:$0x1]
      %v591 = vld [vmem:[%s200 + $0x6c] sm:$0xe]
      %v592 = vld [vmem:[%s200 + $0x70] sm:$0xf]
      %v593 = vld [vmem:[%s200 + $0x74] sm:$0x1]
      %v624 = vunpack.c.l.b16 %v564
      %v625 = vunpack.c.l.b16 %v565
      %v626 = vunpack.c.l.b16 %v566
      %v627 = vunpack.c.l.b16 %v567
      %v628 = vunpack.c.l.b16 %v568
      %v629 = vunpack.c.l.b16 %v569
      %v630 = vunpack.c.l.b16 %v570
      %v631 = vunpack.c.l.b16 %v571
      %v632 = vunpack.c.l.b16 %v572
      %v633 = vunpack.c.l.b16 %v573
      %v634 = vunpack.c.l.b16 %v574
      %v635 = vunpack.c.l.b16 %v575
      %v636 = vunpack.c.l.b16 %v576
      %v637 = vunpack.c.l.b16 %v577
      %v638 = vunpack.c.l.b16 %v578
      %v639 = vunpack.c.l.b16 %v579
      %v640 = vunpack.c.l.b16 %v580
      %v641 = vunpack.c.l.b16 %v581
      %v642 = vunpack.c.l.b16 %v582
      %v643 = vunpack.c.l.b16 %v583
      %v644 = vunpack.c.l.b16 %v584
      %v645 = vunpack.c.l.b16 %v585
      %v646 = vunpack.c.l.b16 %v586
      %v647 = vunpack.c.l.b16 %v587
      %v648 = vunpack.c.l.b16 %v588
      %v649 = vunpack.c.l.b16 %v589
      %v650 = vunpack.c.l.b16 %v590
      %v651 = vunpack.c.l.b16 %v591
      %v652 = vunpack.c.l.b16 %v592
      %v653 = vunpack.c.l.b16 %v593
      %v654 = vpack.c.b16 %v625, %v624
      %v655 = vpack.c.b16 %v626, %v626
      %v656 = vpack.c.b16 %v628, %v627
      %v657 = vpack.c.b16 %v629, %v629
      %v658 = vpack.c.b16 %v631, %v630
      %v659 = vpack.c.b16 %v632, %v632
      %v660 = vpack.c.b16 %v634, %v633
      %v661 = vpack.c.b16 %v635, %v635
      %v662 = vpack.c.b16 %v637, %v636
      %v663 = vpack.c.b16 %v638, %v638
      %v664 = vpack.c.b16 %v640, %v639
      %v665 = vpack.c.b16 %v641, %v641
      %v666 = vpack.c.b16 %v643, %v642
      %v667 = vpack.c.b16 %v644, %v644
      %v668 = vpack.c.b16 %v646, %v645
      %v669 = vpack.c.b16 %v647, %v647
      %v670 = vpack.c.b16 %v649, %v648
      %v671 = vpack.c.b16 %v650, %v650
      %v672 = vpack.c.b16 %v652, %v651
      %v673 = vpack.c.b16 %v653, %v653
      %vm674 = vcmask 1046528
      %v675 = vrot.slane %v654, 1
      %v676 = vrot.slane %v655, 1
      %v677 = vsel %vm674, %v675, %v676
      %v678 = vrot.slane %v656, 1
      %v679 = vrot.slane %v657, 1
      %v680 = vsel %vm674, %v678, %v679
      %v681 = vrot.slane %v658, 1
      %v682 = vrot.slane %v659, 1
      %v683 = vsel %vm674, %v681, %v682
      %v684 = vrot.slane %v660, 1
      %v685 = vrot.slane %v661, 1
      %v686 = vsel %vm674, %v684, %v685
      %v687 = vrot.slane %v662, 1
      %v688 = vrot.slane %v663, 1
      %v689 = vsel %vm674, %v687, %v688
      %v690 = vrot.slane %v664, 1
      %v691 = vrot.slane %v665, 1
      %v692 = vsel %vm674, %v690, %v691
      %v693 = vrot.slane %v666, 1
      %v694 = vrot.slane %v667, 1
      %v695 = vsel %vm674, %v693, %v694
      %v696 = vrot.slane %v668, 1
      %v697 = vrot.slane %v669, 1
      %v698 = vsel %vm674, %v696, %v697
      %v699 = vrot.slane %v670, 1
      %v700 = vrot.slane %v671, 1
      %v701 = vsel %vm674, %v699, %v700
      %v702 = vrot.slane %v672, 1
      %v703 = vrot.slane %v673, 1
      %v704 = vsel %vm674, %v702, %v703
      %705 = vrot.lane.b32.xlu0 %v677, 8
      %v706 = vpop.permute.xlu0 %705
      %707 = vrot.lane.b32.xlu0 %v680, 8
      %v708 = vpop.permute.xlu0 %707
      %709 = vrot.lane.b32.xlu0 %v683, 8
      %v710 = vpop.permute.xlu0 %709
      %711 = vrot.lane.b32.xlu0 %v686, 8
      %v712 = vpop.permute.xlu0 %711
      %713 = vrot.lane.b32.xlu0 %v689, 8
      %v714 = vpop.permute.xlu0 %713
      %715 = vrot.lane.b32.xlu0 %v692, 8
      %v716 = vpop.permute.xlu0 %715
      %717 = vrot.lane.b32.xlu0 %v695, 8
      %v718 = vpop.permute.xlu0 %717
      %719 = vrot.lane.b32.xlu0 %v698, 8
      %v720 = vpop.permute.xlu0 %719
      %721 = vrot.lane.b32.xlu0 %v701, 8
      %v722 = vpop.permute.xlu0 %721
      %723 = vrot.lane.b32.xlu0 %v704, 8
      %v724 = vpop.permute.xlu0 %723
      %vm735 = vcmask 97344
      %736 = vst.msk [vmem:[#allocation2] sm:$0xff] %vm735, %v706
      %737 = vst.msk [vmem:[#allocation2 + $0x8] sm:$0xff] %vm735, %v708
      %738 = vst.msk [vmem:[#allocation2 + $0x10] sm:$0xff] %vm735, %v710
      %739 = vst.msk [vmem:[#allocation2 + $0x18] sm:$0xff] %vm735, %v712
      %740 = vst.msk [vmem:[#allocation2 + $0x20] sm:$0xff] %vm735, %v714
      %741 = vst.msk [vmem:[#allocation2 + $0x28] sm:$0xff] %vm735, %v716
      %742 = vst.msk [vmem:[#allocation2 + $0x30] sm:$0xff] %vm735, %v718
      %743 = vst.msk [vmem:[#allocation2 + $0x38] sm:$0xff] %vm735, %v720
      %744 = vst.msk [vmem:[#allocation2 + $0x40] sm:$0xff] %vm735, %v722
      %745 = vst.msk [vmem:[#allocation2 + $0x48] sm:$0xff] %vm735, %v724
      %v746 = vld [vmem:[%s2] sm:$0x1]
      %v747 = vld [vmem:[#allocation2] sm:$0xff]
      %v748 = vld [vmem:[#allocation2 + $0x8] sm:$0xff]
      %v749 = vld [vmem:[#allocation2 + $0x10] sm:$0xff]
      %v750 = vld [vmem:[#allocation2 + $0x18] sm:$0xff]
      %v751 = vld [vmem:[#allocation2 + $0x20] sm:$0xff]
      %v752 = vld [vmem:[#allocation2 + $0x28] sm:$0xff]
      %v753 = vld [vmem:[#allocation2 + $0x30] sm:$0xff]
      %v754 = vld [vmem:[#allocation2 + $0x38] sm:$0xff]
      %v755 = vld [vmem:[%s1] sm:$0xf]
      %v756 = vld [vmem:[%s1 + $0x4] sm:$0x3]
      %v759 = vunpack.c.l.b16 %v755
      %v760 = vunpack.c.l.b16 %v756
      %v761 = vpack.c.b16 %v760, %v759
      %vm762 = vcmask 97280
      %v764 = vsel %vm762, %v747, 0
      %v767 = vsel %vm762, %v748, 0
      %v770 = vsel %vm762, %v749, 0
      %v773 = vsel %vm762, %v750, 0
      %v776 = vsel %vm762, %v751, 0
      %v779 = vsel %vm762, %v752, 0
      %v782 = vsel %vm762, %v753, 0
      %v785 = vsel %vm762, %v754, 0
      %vm787 = vcmask 1045504
      %v789 = vsel %vm787, %v761, 0
      %791 = vmatprep.subr.bf16.mxu0 0
      %792 = vmatpush1.bf16.msra.mxu0 %v789
      %793 = vmatprep.subr.bf16.mxu0 0
      %794 = vmatpush1.bf16.msra.mxu0 0
      %795 = vmatprep.subr.bf16.mxu0 0
      %796 = vmatpush1.bf16.msra.mxu0 0
      %797 = vmatprep.subr.bf16.mxu0 0
      %798 = vmatpush1.bf16.msra.mxu0 0
      %799 = vmatprep.subr.bf16.mxu0 0
      %800 = vmatpush1.bf16.msra.mxu0 0
      %801 = vmatprep.subr.bf16.mxu0 0
      %802 = vmatpush1.bf16.msra.mxu0 0
      %803 = vmatprep.subr.bf16.mxu0 0
      %804 = vmatpush1.bf16.msra.mxu0 0
      %805 = vmatprep.subr.bf16.mxu0 0
      %806 = vmatpush1.bf16.msra.mxu0 0
      %807 = vmatprep.subr.bf16.mxu0 0
      %808 = vmatpush1.bf16.msra.mxu0 0
      %809 = vmatprep.subr.bf16.mxu0 0
      %810 = vmatpush1.bf16.msra.mxu0 0
      %811 = vmatprep.subr.bf16.mxu0 0
      %812 = vmatpush1.bf16.msra.mxu0 0
      %813 = vmatprep.subr.bf16.mxu0 0
      %814 = vmatpush1.bf16.msra.mxu0 0
      %815 = vmatprep.subr.bf16.mxu0 0
      %816 = vmatpush1.bf16.msra.mxu0 0
      %817 = vmatprep.subr.bf16.mxu0 0
      %818 = vmatpush1.bf16.msra.mxu0 0
      %819 = vmatprep.subr.bf16.mxu0 0
      %820 = vmatpush1.bf16.msra.mxu0 0
      %821 = vmatprep.subr.bf16.mxu0 0
      %822 = vmatpush1.bf16.msra.mxu0 0
      %823 = vmatprep.mubr.bf16.mxu0 0
      %824 = vmatmul.mubr.bf16.gmra.mrb[0].mxu0 %v764
      %v825 = vpop.f32.mrb[0].mxu0
      %v826 = vadd.f32 0.0, %v825
      %v827 = vpop.f32.mrb[0].mxu0
      %v828 = vpop.f32.mrb[0].mxu0
      %v829 = vadd.f32 0.0, %v828
      %v830 = vpop.f32.mrb[0].mxu0
      %831 = vmatprep.mubr.bf16.mxu0 0
      %832 = vmatmul.mubr.bf16.gmra.mrb[0].mxu0 %v767
      %v833 = vpop.f32.mrb[0].mxu0
      %v834 = vadd.f32 0.0, %v833
      %v835 = vpop.f32.mrb[0].mxu0
      %v836 = vpop.f32.mrb[0].mxu0
      %v837 = vadd.f32 0.0, %v836
      %v838 = vpop.f32.mrb[0].mxu0
      %839 = vmatprep.mubr.bf16.mxu0 0
      %840 = vmatmul.mubr.bf16.gmra.mrb[0].mxu0 %v770
      %v841 = vpop.f32.mrb[0].mxu0
      %v842 = vadd.f32 0.0, %v841
      %v843 = vpop.f32.mrb[0].mxu0
      %v844 = vpop.f32.mrb[0].mxu0
      %v845 = vadd.f32 0.0, %v844
      %v846 = vpop.f32.mrb[0].mxu0
      %847 = vmatprep.mubr.bf16.mxu0 0
      %848 = vmatmul.mubr.bf16.gmra.mrb[0].mxu0 %v773
      %v849 = vpop.f32.mrb[0].mxu0
      %v850 = vadd.f32 0.0, %v849
      %v851 = vpop.f32.mrb[0].mxu0
      %v852 = vpop.f32.mrb[0].mxu0
      %v853 = vadd.f32 0.0, %v852
      %v854 = vpop.f32.mrb[0].mxu0
      %855 = vmatprep.mubr.bf16.mxu0 0
      %856 = vmatmul.mubr.bf16.gmra.mrb[0].mxu0 %v776
      %v857 = vpop.f32.mrb[0].mxu0
      %v858 = vadd.f32 0.0, %v857
      %v859 = vpop.f32.mrb[0].mxu0
      %v860 = vpop.f32.mrb[0].mxu0
      %v861 = vadd.f32 0.0, %v860
      %v862 = vpop.f32.mrb[0].mxu0
      %863 = vmatprep.mubr.bf16.mxu0 0
      %864 = vmatmul.mubr.bf16.gmra.mrb[0].mxu0 %v779
      %v865 = vpop.f32.mrb[0].mxu0
      %v866 = vadd.f32 0.0, %v865
      %v867 = vpop.f32.mrb[0].mxu0
      %v868 = vpop.f32.mrb[0].mxu0
      %v869 = vadd.f32 0.0, %v868
      %v870 = vpop.f32.mrb[0].mxu0
      %871 = vmatprep.mubr.bf16.mxu0 0
      %872 = vmatmul.mubr.bf16.gmra.mrb[0].mxu0 %v782
      %v873 = vpop.f32.mrb[0].mxu0
      %v874 = vadd.f32 0.0, %v873
      %v875 = vpop.f32.mrb[0].mxu0
      %v876 = vpop.f32.mrb[0].mxu0
      %v877 = vadd.f32 0.0, %v876
      %v878 = vpop.f32.mrb[0].mxu0
      %879 = vmatprep.mubr.bf16.mxu0 0
      %880 = vmatmul.mubr.bf16.gmra.mrb[0].mxu0 %v785
      %v881 = vpop.f32.mrb[0].mxu0
      %v882 = vadd.f32 0.0, %v881
      %v883 = vpop.f32.mrb[0].mxu0
      %v884 = vpop.f32.mrb[0].mxu0
      %v885 = vadd.f32 0.0, %v884
      %v886 = vpop.f32.mrb[0].mxu0
      %887 = vdwg.mxu0
      %v889 = vlaneseq
      %v890 = vshrl.u32 %v889, 7
      %v891 = vsub.s32 0, %v890
      %v892 = vrot.slane %v746, %v891
      %v894 = vadd.f32 %v892, %v826
      %v895 = vadd.f32 %v892, %v829
      %v896 = vadd.f32 %v892, %v834
      %v897 = vadd.f32 %v892, %v837
      %v898 = vadd.f32 %v892, %v842
      %v899 = vadd.f32 %v892, %v845
      %v900 = vadd.f32 %v892, %v850
      %v901 = vadd.f32 %v892, %v853
      %v902 = vadd.f32 %v892, %v858
      %v903 = vadd.f32 %v892, %v861
      %v904 = vadd.f32 %v892, %v866
      %v905 = vadd.f32 %v892, %v869
      %v906 = vadd.f32 %v892, %v874
      %v907 = vadd.f32 %v892, %v877
      %v908 = vadd.f32 %v892, %v882
      %v909 = vadd.f32 %v892, %v885
      %s910 = scalar_lea.vmem [#allocation2], 8
      %v911 = vld [vmem:[%s910] sm:$0xff]
      %v912 = vld [vmem:[%s910 + $0x8] sm:$0xff]
      %v913 = vld [vmem:[%s910 + $0x10] sm:$0xff]
      %v914 = vld [vmem:[%s910 + $0x18] sm:$0xff]
      %v915 = vld [vmem:[%s910 + $0x20] sm:$0xff]
      %v916 = vld [vmem:[%s910 + $0x28] sm:$0xff]
      %v917 = vld [vmem:[%s910 + $0x30] sm:$0xff]
      %v918 = vld [vmem:[%s910 + $0x38] sm:$0xff]
      %s919 = scalar_lea.vmem %s1, 8
      %v920 = vld [vmem:[%s919] sm:$0xf]
      %v921 = vld [vmem:[%s919 + $0x4] sm:$0x3]
      %v924 = vunpack.c.l.b16 %v920
      %v925 = vunpack.c.l.b16 %v921
      %v926 = vpack.c.b16 %v925, %v924
      %v928 = vsel %vm762, %v911, 0
      %v931 = vsel %vm762, %v912, 0
      %v934 = vsel %vm762, %v913, 0
      %v937 = vsel %vm762, %v914, 0
      %v940 = vsel %vm762, %v915, 0
      %v943 = vsel %vm762, %v916, 0
      %v946 = vsel %vm762, %v917, 0
      %v949 = vsel %vm762, %v918, 0
      %v952 = vsel %vm787, %v926, 0
      %954 = vmatprep.subr.bf16.mxu0 0
      %955 = vmatpush1.bf16.msra.mxu0 %v952
      %956 = vmatprep.subr.bf16.mxu0 0
      %957 = vmatpush1.bf16.msra.mxu0 0
      %958 = vmatprep.subr.bf16.mxu0 0
      %959 = vmatpush1.bf16.msra.mxu0 0
      %960 = vmatprep.subr.bf16.mxu0 0
      %961 = vmatpush1.bf16.msra.mxu0 0
      %962 = vmatprep.subr.bf16.mxu0 0
      %963 = vmatpush1.bf16.msra.mxu0 0
      %964 = vmatprep.subr.bf16.mxu0 0
      %965 = vmatpush1.bf16.msra.mxu0 0
      %966 = vmatprep.subr.bf16.mxu0 0
      %967 = vmatpush1.bf16.msra.mxu0 0
      %968 = vmatprep.subr.bf16.mxu0 0
      %969 = vmatpush1.bf16.msra.mxu0 0
      %970 = vmatprep.subr.bf16.mxu0 0
      %971 = vmatpush1.bf16.msra.mxu0 0
      %972 = vmatprep.subr.bf16.mxu0 0
      %973 = vmatpush1.bf16.msra.mxu0 0
      %974 = vmatprep.subr.bf16.mxu0 0
      %975 = vmatpush1.bf16.msra.mxu0 0
      %976 = vmatprep.subr.bf16.mxu0 0
      %977 = vmatpush1.bf16.msra.mxu0 0
      %978 = vmatprep.subr.bf16.mxu0 0
      %979 = vmatpush1.bf16.msra.mxu0 0
      %980 = vmatprep.subr.bf16.mxu0 0
      %981 = vmatpush1.bf16.msra.mxu0 0
      %982 = vmatprep.subr.bf16.mxu0 0
      %983 = vmatpush1.bf16.msra.mxu0 0
      %984 = vmatprep.subr.bf16.mxu0 0
      %985 = vmatpush1.bf16.msra.mxu0 0
      %986 = vmatprep.mubr.bf16.mxu0 0
      %987 = vmatmul.mubr.bf16.gmra.mrb[0].mxu0 %v928
      %v988 = vpop.f32.mrb[0].mxu0
      %v989 = vadd.f32 0.0, %v988
      %v990 = vpop.f32.mrb[0].mxu0
      %v991 = vpop.f32.mrb[0].mxu0
      %v992 = vadd.f32 0.0, %v991
      %v993 = vpop.f32.mrb[0].mxu0
      %994 = vmatprep.mubr.bf16.mxu0 0
      %995 = vmatmul.mubr.bf16.gmra.mrb[0].mxu0 %v931
      %v996 = vpop.f32.mrb[0].mxu0
      %v997 = vadd.f32 0.0, %v996
      %v998 = vpop.f32.mrb[0].mxu0
      %v999 = vpop.f32.mrb[0].mxu0
      %v1000 = vadd.f32 0.0, %v999
      %v1001 = vpop.f32.mrb[0].mxu0
      %1002 = vmatprep.mubr.bf16.mxu0 0
      %1003 = vmatmul.mubr.bf16.gmra.mrb[0].mxu0 %v934
      %v1004 = vpop.f32.mrb[0].mxu0
      %v1005 = vadd.f32 0.0, %v1004
      %v1006 = vpop.f32.mrb[0].mxu0
      %v1007 = vpop.f32.mrb[0].mxu0
      %v1008 = vadd.f32 0.0, %v1007
      %v1009 = vpop.f32.mrb[0].mxu0
      %1010 = vmatprep.mubr.bf16.mxu0 0
      %1011 = vmatmul.mubr.bf16.gmra.mrb[0].mxu0 %v937
      %v1012 = vpop.f32.mrb[0].mxu0
      %v1013 = vadd.f32 0.0, %v1012
      %v1014 = vpop.f32.mrb[0].mxu0
      %v1015 = vpop.f32.mrb[0].mxu0
      %v1016 = vadd.f32 0.0, %v1015
      %v1017 = vpop.f32.mrb[0].mxu0
      %1018 = vmatprep.mubr.bf16.mxu0 0
      %1019 = vmatmul.mubr.bf16.gmra.mrb[0].mxu0 %v940
      %v1020 = vpop.f32.mrb[0].mxu0
      %v1021 = vadd.f32 0.0, %v1020
      %v1022 = vpop.f32.mrb[0].mxu0
      %v1023 = vpop.f32.mrb[0].mxu0
      %v1024 = vadd.f32 0.0, %v1023
      %v1025 = vpop.f32.mrb[0].mxu0
      %1026 = vmatprep.mubr.bf16.mxu0 0
      %1027 = vmatmul.mubr.bf16.gmra.mrb[0].mxu0 %v943
      %v1028 = vpop.f32.mrb[0].mxu0
      %v1029 = vadd.f32 0.0, %v1028
      %v1030 = vpop.f32.mrb[0].mxu0
      %v1031 = vpop.f32.mrb[0].mxu0
      %v1032 = vadd.f32 0.0, %v1031
      %v1033 = vpop.f32.mrb[0].mxu0
      %1034 = vmatprep.mubr.bf16.mxu0 0
      %1035 = vmatmul.mubr.bf16.gmra.mrb[0].mxu0 %v946
      %v1036 = vpop.f32.mrb[0].mxu0
      %v1037 = vadd.f32 0.0, %v1036
      %v1038 = vpop.f32.mrb[0].mxu0
      %v1039 = vpop.f32.mrb[0].mxu0
      %v1040 = vadd.f32 0.0, %v1039
      %v1041 = vpop.f32.mrb[0].mxu0
      %1042 = vmatprep.mubr.bf16.mxu0 0
      %1043 = vmatmul.mubr.bf16.gmra.mrb[0].mxu0 %v949
      %v1044 = vpop.f32.mrb[0].mxu0
      %v1045 = vadd.f32 0.0, %v1044
      %v1046 = vpop.f32.mrb[0].mxu0
      %v1047 = vpop.f32.mrb[0].mxu0
      %v1048 = vadd.f32 0.0, %v1047
      %v1049 = vpop.f32.mrb[0].mxu0
      %1050 = vdwg.mxu0
      %v1051 = vadd.f32 %v894, %v989
      %v1052 = vadd.f32 %v895, %v992
      %v1053 = vadd.f32 %v896, %v997
      %v1054 = vadd.f32 %v897, %v1000
      %v1055 = vadd.f32 %v898, %v1005
      %v1056 = vadd.f32 %v899, %v1008
      %v1057 = vadd.f32 %v900, %v1013
      %v1058 = vadd.f32 %v901, %v1016
      %v1059 = vadd.f32 %v902, %v1021
      %v1060 = vadd.f32 %v903, %v1024
      %v1061 = vadd.f32 %v904, %v1029
      %v1062 = vadd.f32 %v905, %v1032
      %v1063 = vadd.f32 %v906, %v1037
      %v1064 = vadd.f32 %v907, %v1040
      %v1065 = vadd.f32 %v908, %v1045
      %v1066 = vadd.f32 %v909, %v1048
      %s1067 = scalar_lea.vmem [#allocation2], 16
      %v1068 = vld [vmem:[%s1067] sm:$0xff]
      %v1069 = vld [vmem:[%s1067 + $0x8] sm:$0xff]
      %v1070 = vld [vmem:[%s1067 + $0x10] sm:$0xff]
      %v1071 = vld [vmem:[%s1067 + $0x18] sm:$0xff]
      %v1072 = vld [vmem:[%s1067 + $0x20] sm:$0xff]
      %v1073 = vld [vmem:[%s1067 + $0x28] sm:$0xff]
      %v1074 = vld [vmem:[%s1067 + $0x30] sm:$0xff]
      %v1075 = vld [vmem:[%s1067 + $0x38] sm:$0xff]
      %s1076 = scalar_lea.vmem %s1, 16
      %v1077 = vld [vmem:[%s1076] sm:$0xf]
      %v1078 = vld [vmem:[%s1076 + $0x4] sm:$0x3]
      %v1081 = vunpack.c.l.b16 %v1077
      %v1082 = vunpack.c.l.b16 %v1078
      %v1083 = vpack.c.b16 %v1082, %v1081
      %v1085 = vsel %vm762, %v1068, 0
      %v1088 = vsel %vm762, %v1069, 0
      %v1091 = vsel %vm762, %v1070, 0
      %v1094 = vsel %vm762, %v1071, 0
      %v1097 = vsel %vm762, %v1072, 0
      %v1100 = vsel %vm762, %v1073, 0
      %v1103 = vsel %vm762, %v1074, 0
      %v1106 = vsel %vm762, %v1075, 0
      %v1109 = vsel %vm787, %v1083, 0
      %1111 = vmatprep.subr.bf16.mxu0 0
      %1112 = vmatpush1.bf16.msra.mxu0 %v1109
      %1113 = vmatprep.subr.bf16.mxu0 0
      %1114 = vmatpush1.bf16.msra.mxu0 0
      %1115 = vmatprep.subr.bf16.mxu0 0
      %1116 = vmatpush1.bf16.msra.mxu0 0
      %1117 = vmatprep.subr.bf16.mxu0 0
      %1118 = vmatpush1.bf16.msra.mxu0 0
      %1119 = vmatprep.subr.bf16.mxu0 0
      %1120 = vmatpush1.bf16.msra.mxu0 0
      %1121 = vmatprep.subr.bf16.mxu0 0
      %1122 = vmatpush1.bf16.msra.mxu0 0
      %1123 = vmatprep.subr.bf16.mxu0 0
      %1124 = vmatpush1.bf16.msra.mxu0 0
      %1125 = vmatprep.subr.bf16.mxu0 0
      %1126 = vmatpush1.bf16.msra.mxu0 0
      %1127 = vmatprep.subr.bf16.mxu0 0
      %1128 = vmatpush1.bf16.msra.mxu0 0
      %1129 = vmatprep.subr.bf16.mxu0 0
      %1130 = vmatpush1.bf16.msra.mxu0 0
      %1131 = vmatprep.subr.bf16.mxu0 0
      %1132 = vmatpush1.bf16.msra.mxu0 0
      %1133 = vmatprep.subr.bf16.mxu0 0
      %1134 = vmatpush1.bf16.msra.mxu0 0
      %1135 = vmatprep.subr.bf16.mxu0 0
      %1136 = vmatpush1.bf16.msra.mxu0 0
      %1137 = vmatprep.subr.bf16.mxu0 0
      %1138 = vmatpush1.bf16.msra.mxu0 0
      %1139 = vmatprep.subr.bf16.mxu0 0
      %1140 = vmatpush1.bf16.msra.mxu0 0
      %1141 = vmatprep.subr.bf16.mxu0 0
      %1142 = vmatpush1.bf16.msra.mxu0 0
      %1143 = vmatprep.mubr.bf16.mxu0 0
      %1144 = vmatmul.mubr.bf16.gmra.mrb[0].mxu0 %v1085
      %v1145 = vpop.f32.mrb[0].mxu0
      %v1146 = vadd.f32 0.0, %v1145
      %v1147 = vpop.f32.mrb[0].mxu0
      %v1148 = vpop.f32.mrb[0].mxu0
      %v1149 = vadd.f32 0.0, %v1148
      %v1150 = vpop.f32.mrb[0].mxu0
      %1151 = vmatprep.mubr.bf16.mxu0 0
      %1152 = vmatmul.mubr.bf16.gmra.mrb[0].mxu0 %v1088
      %v1153 = vpop.f32.mrb[0].mxu0
      %v1154 = vadd.f32 0.0, %v1153
      %v1155 = vpop.f32.mrb[0].mxu0
      %v1156 = vpop.f32.mrb[0].mxu0
      %v1157 = vadd.f32 0.0, %v1156
      %v1158 = vpop.f32.mrb[0].mxu0
      %1159 = vmatprep.mubr.bf16.mxu0 0
      %1160 = vmatmul.mubr.bf16.gmra.mrb[0].mxu0 %v1091
      %v1161 = vpop.f32.mrb[0].mxu0
      %v1162 = vadd.f32 0.0, %v1161
      %v1163 = vpop.f32.mrb[0].mxu0
      %v1164 = vpop.f32.mrb[0].mxu0
      %v1165 = vadd.f32 0.0, %v1164
      %v1166 = vpop.f32.mrb[0].mxu0
      %1167 = vmatprep.mubr.bf16.mxu0 0
      %1168 = vmatmul.mubr.bf16.gmra.mrb[0].mxu0 %v1094
      %v1169 = vpop.f32.mrb[0].mxu0
      %v1170 = vadd.f32 0.0, %v1169
      %v1171 = vpop.f32.mrb[0].mxu0
      %v1172 = vpop.f32.mrb[0].mxu0
      %v1173 = vadd.f32 0.0, %v1172
      %v1174 = vpop.f32.mrb[0].mxu0
      %1175 = vmatprep.mubr.bf16.mxu0 0
      %1176 = vmatmul.mubr.bf16.gmra.mrb[0].mxu0 %v1097
      %v1177 = vpop.f32.mrb[0].mxu0
      %v1178 = vadd.f32 0.0, %v1177
      %v1179 = vpop.f32.mrb[0].mxu0
      %v1180 = vpop.f32.mrb[0].mxu0
      %v1181 = vadd.f32 0.0, %v1180
      %v1182 = vpop.f32.mrb[0].mxu0
      %1183 = vmatprep.mubr.bf16.mxu0 0
      %1184 = vmatmul.mubr.bf16.gmra.mrb[0].mxu0 %v1100
      %v1185 = vpop.f32.mrb[0].mxu0
      %v1186 = vadd.f32 0.0, %v1185
      %v1187 = vpop.f32.mrb[0].mxu0
      %v1188 = vpop.f32.mrb[0].mxu0
      %v1189 = vadd.f32 0.0, %v1188
      %v1190 = vpop.f32.mrb[0].mxu0
      %1191 = vmatprep.mubr.bf16.mxu0 0
      %1192 = vmatmul.mubr.bf16.gmra.mrb[0].mxu0 %v1103
      %v1193 = vpop.f32.mrb[0].mxu0
      %v1194 = vadd.f32 0.0, %v1193
      %v1195 = vpop.f32.mrb[0].mxu0
      %v1196 = vpop.f32.mrb[0].mxu0
      %v1197 = vadd.f32 0.0, %v1196
      %v1198 = vpop.f32.mrb[0].mxu0
      %1199 = vmatprep.mubr.bf16.mxu0 0
      %1200 = vmatmul.mubr.bf16.gmra.mrb[0].mxu0 %v1106
      %v1201 = vpop.f32.mrb[0].mxu0
      %v1202 = vadd.f32 0.0, %v1201
      %v1203 = vpop.f32.mrb[0].mxu0
      %v1204 = vpop.f32.mrb[0].mxu0
      %v1205 = vadd.f32 0.0, %v1204
      %v1206 = vpop.f32.mrb[0].mxu0
      %1207 = vdwg.mxu0
      %v1208 = vadd.f32 %v1051, %v1146
      %v1209 = vadd.f32 %v1052, %v1149
      %v1210 = vadd.f32 %v1053, %v1154
      %v1211 = vadd.f32 %v1054, %v1157
      %v1212 = vadd.f32 %v1055, %v1162
      %v1213 = vadd.f32 %v1056, %v1165
      %v1214 = vadd.f32 %v1057, %v1170
      %v1215 = vadd.f32 %v1058, %v1173
      %v1216 = vadd.f32 %v1059, %v1178
      %v1217 = vadd.f32 %v1060, %v1181
      %v1218 = vadd.f32 %v1061, %v1186
      %v1219 = vadd.f32 %v1062, %v1189
      %v1220 = vadd.f32 %v1063, %v1194
      %v1221 = vadd.f32 %v1064, %v1197
      %v1222 = vadd.f32 %v1065, %v1202
      %v1223 = vadd.f32 %v1066, %v1205
      %v1224 = vpack.c.bf16 %v1209, %v1208
      %v1225 = vpack.c.bf16 %v1211, %v1210
      %v1226 = vpack.c.bf16 %v1213, %v1212
      %v1227 = vpack.c.bf16 %v1215, %v1214
      %v1228 = vpack.c.bf16 %v1217, %v1216
      %v1229 = vpack.c.bf16 %v1219, %v1218
      %v1230 = vpack.c.bf16 %v1221, %v1220
      %v1231 = vpack.c.bf16 %v1223, %v1222
      %v1240 = vunpack.c.l.b16 %v1224
      %v1241 = vunpack.c.h.b16 %v1224
      %v1242 = vunpack.c.l.b16 %v1225
      %v1243 = vunpack.c.h.b16 %v1225
      %v1244 = vunpack.c.l.b16 %v1226
      %v1245 = vunpack.c.h.b16 %v1226
      %v1246 = vunpack.c.l.b16 %v1227
      %v1247 = vunpack.c.h.b16 %v1227
      %v1248 = vunpack.c.l.b16 %v1228
      %v1249 = vunpack.c.h.b16 %v1228
      %v1250 = vunpack.c.l.b16 %v1229
      %v1251 = vunpack.c.h.b16 %v1229
      %v1252 = vunpack.c.l.b16 %v1230
      %v1253 = vunpack.c.h.b16 %v1230
      %v1254 = vunpack.c.l.b16 %v1231
      %v1255 = vunpack.c.h.b16 %v1231
      %v1256 = vpack.c.b16 %v1240, %v1240
      %v1257 = vpack.c.b16 %v1241, %v1241
      %v1258 = vpack.c.b16 %v1242, %v1242
      %v1259 = vpack.c.b16 %v1243, %v1243
      %v1260 = vpack.c.b16 %v1244, %v1244
      %v1261 = vpack.c.b16 %v1245, %v1245
      %v1262 = vpack.c.b16 %v1246, %v1246
      %v1263 = vpack.c.b16 %v1247, %v1247
      %v1264 = vpack.c.b16 %v1248, %v1248
      %v1265 = vpack.c.b16 %v1249, %v1249
      %v1266 = vpack.c.b16 %v1250, %v1250
      %v1267 = vpack.c.b16 %v1251, %v1251
      %v1268 = vpack.c.b16 %v1252, %v1252
      %v1269 = vpack.c.b16 %v1253, %v1253
      %v1270 = vpack.c.b16 %v1254, %v1254
      %v1271 = vpack.c.b16 %v1255, %v1255
      %vm1288 = vcmask 125952
      %1289 = vst.msk [vmem:[%s194] sm:$0xf] %vm1288, %v1256
      %1290 = vst.msk [vmem:[%s194 + $0x4] sm:$0xf] %vm1288, %v1257
      %1291 = vst.msk [vmem:[%s194 + $0x10] sm:$0xf] %vm1288, %v1258
      %1292 = vst.msk [vmem:[%s194 + $0x14] sm:$0xf] %vm1288, %v1259
      %1293 = vst.msk [vmem:[%s194 + $0x20] sm:$0xf] %vm1288, %v1260
      %1294 = vst.msk [vmem:[%s194 + $0x24] sm:$0xf] %vm1288, %v1261
      %1295 = vst.msk [vmem:[%s194 + $0x30] sm:$0xf] %vm1288, %v1262
      %1296 = vst.msk [vmem:[%s194 + $0x34] sm:$0xf] %vm1288, %v1263
      %1297 = vst.msk [vmem:[%s194 + $0x40] sm:$0xf] %vm1288, %v1264
      %1298 = vst.msk [vmem:[%s194 + $0x44] sm:$0xf] %vm1288, %v1265
      %1299 = vst.msk [vmem:[%s194 + $0x50] sm:$0xf] %vm1288, %v1266
      %1300 = vst.msk [vmem:[%s194 + $0x54] sm:$0xf] %vm1288, %v1267
      %1301 = vst.msk [vmem:[%s194 + $0x60] sm:$0xf] %vm1288, %v1268
      %1302 = vst.msk [vmem:[%s194 + $0x64] sm:$0xf] %vm1288, %v1269
      %1303 = vst.msk [vmem:[%s194 + $0x70] sm:$0xf] %vm1288, %v1270
      %1304 = vst.msk [vmem:[%s194 + $0x74] sm:$0xf] %vm1288, %v1271
      %1305 = vrot.lane.b32.xlu0 %v1256, 112
      %v1306 = vpop.permute.xlu0 %1305
      %1307 = vrot.lane.b32.xlu0 %v1257, 112
      %v1308 = vpop.permute.xlu0 %1307
      %1309 = vrot.lane.b32.xlu0 %v1258, 112
      %v1310 = vpop.permute.xlu0 %1309
      %1311 = vrot.lane.b32.xlu0 %v1259, 112
      %v1312 = vpop.permute.xlu0 %1311
      %1313 = vrot.lane.b32.xlu0 %v1260, 112
      %v1314 = vpop.permute.xlu0 %1313
      %1315 = vrot.lane.b32.xlu0 %v1261, 112
      %v1316 = vpop.permute.xlu0 %1315
      %1317 = vrot.lane.b32.xlu0 %v1262, 112
      %v1318 = vpop.permute.xlu0 %1317
      %1319 = vrot.lane.b32.xlu0 %v1263, 112
      %v1320 = vpop.permute.xlu0 %1319
      %1321 = vrot.lane.b32.xlu0 %v1264, 112
      %v1322 = vpop.permute.xlu0 %1321
      %1323 = vrot.lane.b32.xlu0 %v1265, 112
      %v1324 = vpop.permute.xlu0 %1323
      %1325 = vrot.lane.b32.xlu0 %v1266, 112
      %v1326 = vpop.permute.xlu0 %1325
      %1327 = vrot.lane.b32.xlu0 %v1267, 112
      %v1328 = vpop.permute.xlu0 %1327
      %1329 = vrot.lane.b32.xlu0 %v1268, 112
      %v1330 = vpop.permute.xlu0 %1329
      %1331 = vrot.lane.b32.xlu0 %v1269, 112
      %v1332 = vpop.permute.xlu0 %1331
      %1333 = vrot.lane.b32.xlu0 %v1270, 112
      %v1334 = vpop.permute.xlu0 %1333
      %1335 = vrot.lane.b32.xlu0 %v1271, 112
      %v1336 = vpop.permute.xlu0 %1335
      %s1353 = scalar_lea.vmem %s194, 8
      %1354 = vst.msk [vmem:[%s1353] sm:$0xf] %vm1288, %v1306
      %1355 = vst.msk [vmem:[%s1353 + $0x4] sm:$0xf] %vm1288, %v1308
      %1356 = vst.msk [vmem:[%s1353 + $0x10] sm:$0xf] %vm1288, %v1310
      %1357 = vst.msk [vmem:[%s1353 + $0x14] sm:$0xf] %vm1288, %v1312
      %1358 = vst.msk [vmem:[%s1353 + $0x20] sm:$0xf] %vm1288, %v1314
      %1359 = vst.msk [vmem:[%s1353 + $0x24] sm:$0xf] %vm1288, %v1316
      %1360 = vst.msk [vmem:[%s1353 + $0x30] sm:$0xf] %vm1288, %v1318
      %1361 = vst.msk [vmem:[%s1353 + $0x34] sm:$0xf] %vm1288, %v1320
      %1362 = vst.msk [vmem:[%s1353 + $0x40] sm:$0xf] %vm1288, %v1322
      %1363 = vst.msk [vmem:[%s1353 + $0x44] sm:$0xf] %vm1288, %v1324
      %1364 = vst.msk [vmem:[%s1353 + $0x50] sm:$0xf] %vm1288, %v1326
      %1365 = vst.msk [vmem:[%s1353 + $0x54] sm:$0xf] %vm1288, %v1328
      %1366 = vst.msk [vmem:[%s1353 + $0x60] sm:$0xf] %vm1288, %v1330
      %1367 = vst.msk [vmem:[%s1353 + $0x64] sm:$0xf] %vm1288, %v1332
      %1368 = vst.msk [vmem:[%s1353 + $0x70] sm:$0xf] %vm1288, %v1334
      %1369 = vst.msk [vmem:[%s1353 + $0x74] sm:$0xf] %vm1288, %v1336
      %s1370 = smul.u32 8, %s19
      %p1371 = scmp.lt.s32.totalorder %s18, 1
      %s1372 = scalar_select %p1371, %s18, 1
      %p1373 = scmp.lt.s32.totalorder %s1370, 15
      %s1374 = scalar_select %p1373, %s1370, 15
      %s1375 = smul.addr %s1374, 4
      %s1376 = smul.addr %s1372, 64
      %s1377 = sadd.s32 %s1375, %s1376
      %s1378 = smul.addr %s1377, 4
      %s1379 = scalar_lea.vmem %s3, %s1378
      // Predicated region
      $region33: #{upsample_forward.1} parent=31 // pred_check
        %p1380 = pneg %p114
      $region34: #{upsample_forward.1} parent=31 // pred_check_branch
        %1382 = sbr.rel (%p1380) target = $region36
      $region35: #{upsample_forward.1} parent=31 // pred_region
        %s1383 = smul.u32 8, %s19
      $region36: #{upsample_forward.1} parent=31 // pred_fallthru
        _
    $region32: #{upsample_forward.1} parent=5 // pred_fallthru
      _
    %p1384 = scmp.le.s32.totalorder 2, %s9
    // Predicated region
    $region37: #{upsample_forward.1} parent=5 // pred_check
      %p1385 = pneg %p1384
    $region38: #{upsample_forward.1} parent=5 // pred_check_branch
      %1387 = sbr.rel (%p1385) target = $region40
    $region39: #{upsample_forward.1} parent=5 // pred_region
      %s1388 = ssub.s32 %s9, 2
      // Predicated region
      $region41: #{upsample_forward.1} parent=39 // pred_check
        %p1389 = pneg %p120
      $region42: #{upsample_forward.1} parent=39 // pred_check_branch
        %1391 = sbr.rel (%p1389) target = $region44
      $region43: #{upsample_forward.1} parent=39 // pred_region
        %s1392 = smul.u32 8, %s21
        %p1393 = scmp.lt.s32.totalorder %s20, 1
        %s1394 = scalar_select %p1393, %s20, 1
        %p1395 = scmp.lt.s32.totalorder %s1392, 15
        %s1396 = scalar_select %p1395, %s1392, 15
        %s1397 = smul.addr %s1396, 4
        %s1398 = smul.addr %s1394, 64
        %s1399 = sadd.s32 %s1397, %s1398
        %s1400 = smul.addr %s1399, 4
        %s1401 = scalar_lea.vmem %s3, %s1400
      $region44: #{upsample_forward.1} parent=39 // pred_fallthru
        _
    $region40: #{upsample_forward.1} parent=5 // pred_fallthru
      _
  $region6: #{upsample_forward.1} parent=0 // loop_footer
    %s13 = sadd.s32 1, %s9
  $region7: #{upsample_forward.1} parent=0 // loop_footer_branch
    %8 = sbr.rel target = $region3
  $region8: #{upsample_forward.1} parent=0 // loop_exit
    _

</llo_original>
